<compile_context>
chip_gen: v5e
topology: v5e:2x2
jax: 0.10.0
libtpu: 0.0.40
codegen_flags: <defaults>
</compile_context>

<pallas_src>
import math
import jax
import jax.numpy as jnp
from jax.experimental import pallas as pl
from jax.experimental.pallas import tpu as pltpu

# ---------------- config (stand-in for `opts`) ----------------
DIM = 128                # opts.dim (keeps chunk/concat lane aligned)
N_MLP_LAYERS = 2         # opts.n_mlp_layers : Linear -> ReLU -> Linear
N_ROUNDS = 2             # opts.n_rounds
N_ATTN_ROUNDS = 1        # opts.n_attn_rounds
N_ATTN_HEADS = 2         # opts.n_attn_heads (dead for seq-len-1 attention)
TASK = "satisfiability"  # opts.task  (non model-counting branch)
EMBED = 2 * DIM
DENOM = math.sqrt(DIM)
# TODO(synk): the 'model-counting' branch (Bethe free energy readout, c_readout)
# is not implemented; only the task != 'model-counting' path is reproduced.

# ---------------- synthetic graph sizes ----------------
NUM_EDGES = 16           # data.num_edges (even: pos/neg literal per variable-edge)
N_VARS = 4
L_SIZE = 2 * N_VARS      # data.l_size.sum()
M1 = 24                  # len(c2l_msg_repeat_index) == len(c2l_msg_scatter_index)
N_AGGR = 24              # len(l2c_msg_scatter_index)
M2 = 32                  # len(l2c_msg_aggr_repeat_index)

# ---------------- packed-slab layout ----------------
# weight slab (bf16, all (in,128) weights row-stacked; l_readout w2 padded to 128 cols)
ROW_LU1, ROW_LU2 = 0, 128          # l2c_msg_update
ROW_LN1, ROW_LN2 = 256, 512        # l2c_msg_norm (w1 has 256 rows)
ROW_CU1, ROW_CU2 = 640, 768        # c2l_msg_update
ROW_LR1, ROW_LR2 = 896, 1024       # l_readout
W128_ROWS = 1152

# bias slab rows (f32, each row padded to 256 lanes)
B_LU1, B_LU2, B_LN1, B_LN2 = 0, 1, 2, 3
B_CU1, B_CU2, B_LR1, B_LR2 = 4, 5, 6, 7
B_ATTN, B_INIT = 8, 9              # fused-attention bias ; c2l_edges_init/sqrt(dim)
BIAS_ROWS = 16

# graph slab rows (f32 dense 0/1 scatter matrices, permuted edge order)
G_C2L = 0
G_AGGR = NUM_EDGES
G_LSE = NUM_EDGES + N_AGGR
G_SIGN = 2 * NUM_EDGES + N_AGGR
GRAPH_ROWS = 2 * NUM_EDGES + N_AGGR + L_SIZE   # 64
GRAPH_COLS = 32


# ==================== kernel ====================
def _nsnet_kernel(graph_ref, w128_ref, wattn_ref, bias_ref, out_ref):
  f32, bf16 = jnp.float32, jnp.bfloat16
  E, D, H = NUM_EDGES, DIM, NUM_EDGES // 2

  def mm(x, w):
    # bf16 operands on the MXU, f32 accumulation.
    return jnp.dot(x.astype(bf16), w, preferred_element_type=f32)

  def bias(row, width=DIM):
    return bias_ref[row:row + 1, 0:width]               # (1, width) f32

  def mlp(x, w1_row, w1_rows, b1_row, w2_row, b2_row):
    # N_MLP_LAYERS == 2: Linear -> ReLU -> Linear
    h = jnp.maximum(mm(x, w128_ref[w1_row:w1_row + w1_rows, :]) + bias(b1_row), 0.0)
    return mm(h, w128_ref[w2_row:w2_row + D, :]) + bias(b2_row)

  # dense 0/1 scatter matrices for this graph (f32 -> exact sums), already in the
  # permuted edge order [even edges ; odd edges].
  g = graph_ref[...]
  a_c2l = g[G_C2L:G_C2L + E, 0:E]                       # (E, E)
  a_aggr = g[G_AGGR:G_AGGR + N_AGGR, 0:E]               # (N_AGGR, E)
  m_lse = g[G_LSE:G_LSE + E, 0:N_AGGR]                  # (E, N_AGGR)
  a_sign = g[G_SIGN:G_SIGN + L_SIZE, 0:E]               # (L_SIZE, E)

  # 1. c2l_edges_init / sqrt(dim), pre-scaled on the host (bias row B_INIT).
  #    l2c_edges_init is dead in the reference forward (overwritten before use).
  c2l = jnp.broadcast_to(bias(B_INIT), (E, D))

  for _ in range(N_ROUNDS):
    # 2.1 c2l message: scatter_sum == ONE dense (E,E) matmul (even/odd stacked)
    msg = jnp.dot(a_c2l, c2l, preferred_element_type=f32)
    new = mlp(msg, ROW_LU1, D, B_LU1, ROW_LU2, B_LU2)   # l2c_edges_feat_new (perm)

    # reshape(num_edges//2, 2*dim): permuted rows [even; odd] -> lane concat
    v2c = jnp.concatenate([new[0:H, :], new[H:E, :]], axis=1)   # (E//2, 2*D)
    for _ in range(N_ATTN_ROUNDS):
      # seq-len-1 MHA (softmax over a 1x1 score == 1, Q/K dead) + attn_proj,
      # fused on the host into a single affine map.  Only valid for L == 1.
      v2c = mm(v2c, wattn_ref[...]) + bias(B_ATTN, 2 * D)

    p_half = v2c[:, 0:D]                                # pv2c_edges_feat_new
    n_half = v2c[:, D:2 * D]                            # nv2c_edges_feat_new
    feat_inv = jnp.concatenate([n_half, p_half], axis=0)          # l2c_edges_feat_inv (perm)
    l2c = mlp(jnp.concatenate([new, feat_inv], axis=1),
              ROW_LN1, 2 * D, B_LN1, ROW_LN2, B_LN2)    # l2c_edges_feat (perm)

    # 2.3 l2c_msg_aggr = scatter_sum -> single dense (N_AGGR, E) matmul
    aggr = jnp.dot(a_aggr, l2c, preferred_element_type=f32)

    # scatter_logsumexp: log(M @ exp(x - c)) + c, global per-feature max + clamp.
    # TODO(synk): a per-group (segment) max would be fully robust; the clamp only
    # bounds the error if an entire group sits ~100 below its column max.
    c = jnp.max(aggr, axis=0, keepdims=True)
    s = jnp.dot(m_lse, jnp.exp(aggr - c), preferred_element_type=f32)
    l2c_msg = jnp.log(jnp.maximum(s, jnp.finfo(f32).tiny)) + c

    c2l = mlp(l2c_msg, ROW_CU1, D, B_CU1, ROW_CU2, B_CU2)

  # readout: l_logit = l_readout(scatter_sum(c2l_feat, sign_l_edge_index)).
  # a_sign rows are stacked [even literals ; odd literals]; logits live in col 0.
  logits = mlp(jnp.dot(a_sign, c2l, preferred_element_type=f32),
               ROW_LR1, D, B_LR1, ROW_LR2, B_LR2)       # (L_SIZE, D)
  le = logits[0:N_VARS, 0:1]                            # l_logit[0::2]
  lo = logits[N_VARS:L_SIZE, 0:1]                       # l_logit[1::2]
  m = jnp.maximum(le, lo)
  ee = jnp.exp(le - m)
  eo = jnp.exp(lo - m)
  z = ee + eo
  out_ref[...] = jnp.concatenate([ee / z, eo / z], axis=1)   # Softmax(dim=1)


# ==================== host wrapper ====================
def nsnet_forward(graph_slabs, w128, wattn, bias_slab):
  batch = graph_slabs.shape[0]
  return pl.pallas_call(
      _nsnet_kernel,
      out_shape=jax.ShapeDtypeStruct((batch, N_VARS, 2), jnp.float32),
      grid=(batch,),
      in_specs=[
          # per-graph matrices: one block per batch element
          pl.BlockSpec((None, GRAPH_ROWS, GRAPH_COLS), lambda b: (b, 0, 0)),
          # weights / biases: constant block -> stay resident in VMEM across the grid
          pl.BlockSpec((W128_ROWS, DIM), lambda b: (0, 0)),
          pl.BlockSpec((EMBED, EMBED), lambda b: (0, 0)),
          pl.BlockSpec((BIAS_ROWS, EMBED), lambda b: (0, 0)),
      ],
      out_specs=pl.BlockSpec((None, N_VARS, 2), lambda b: (b, 0, 0)),
      compiler_params=pltpu.CompilerParams(dimension_semantics=("parallel",)),
  )(graph_slabs, w128, wattn, bias_slab)


# ---------------- glue: synthetic graph -> dense one-hot matrices ----------------
def one_hot_rows(idx, n_rows):
  # (n_rows, len(idx)) with out[i, j] = 1.0 iff idx[j] == i
  return (idx[None, :] == jnp.arange(n_rows)[:, None]).astype(jnp.float32)


def build_graph_dense(key):
  ks = jax.random.split(key, 6)
  sign_l_edge_index = jax.random.randint(ks[0], (NUM_EDGES,), 0, L_SIZE)
  c2l_msg_repeat_index = jax.random.randint(ks[1], (M1,), 0, NUM_EDGES)
  c2l_msg_scatter_index = jax.random.randint(ks[2], (M1,), 0, NUM_EDGES)
  l2c_msg_aggr_repeat_index = jax.random.randint(ks[3], (M2,), 0, NUM_EDGES)
  l2c_msg_aggr_scatter_index = jax.random.randint(ks[4], (M2,), 0, N_AGGR)
  # every edge id appears at least once -> no empty scatter_logsumexp group
  l2c_msg_scatter_index = jnp.concatenate(
      [jnp.arange(NUM_EDGES),
       jax.random.randint(ks[5], (N_AGGR - NUM_EDGES,), 0, NUM_EDGES)])

  # scatter_sum(src[repeat], scatter, dim_size=R) == (S @ G) @ src
  a_c2l = (one_hot_rows(c2l_msg_scatter_index, NUM_EDGES)
           @ one_hot_rows(c2l_msg_repeat_index, NUM_EDGES).T)        # (E, E)
  a_aggr = (one_hot_rows(l2c_msg_aggr_scatter_index, N_AGGR)
            @ one_hot_rows(l2c_msg_aggr_repeat_index, NUM_EDGES).T)  # (N_AGGR, E)
  m_lse = one_hot_rows(l2c_msg_scatter_index, NUM_EDGES)             # (E, N_AGGR)
  a_sign = one_hot_rows(sign_l_edge_index, L_SIZE)                   # (L_SIZE, E)
  return {"a_c2l": a_c2l, "a_aggr": a_aggr, "m_lse": m_lse, "a_sign": a_sign}


def pack_graph(dense):
  """Permute to [even edges ; odd edges] order and pack into one f32 slab."""
  eperm = jnp.concatenate([jnp.arange(0, NUM_EDGES, 2), jnp.arange(1, NUM_EDGES, 2)])
  lperm = jnp.concatenate([jnp.arange(0, L_SIZE, 2), jnp.arange(1, L_SIZE, 2)])
  slab = jnp.zeros((GRAPH_ROWS, GRAPH_COLS), jnp.float32)
  slab = slab.at[G_C2L:G_C2L + NUM_EDGES, 0:NUM_EDGES].set(dense["a_c2l"][eperm][:, eperm])
  slab = slab.at[G_AGGR:G_AGGR + N_AGGR, 0:NUM_EDGES].set(dense["a_aggr"][:, eperm])
  slab = slab.at[G_LSE:G_LSE + NUM_EDGES, 0:N_AGGR].set(dense["m_lse"][eperm])
  slab = slab.at[G_SIGN:G_SIGN + L_SIZE, 0:NUM_EDGES].set(dense["a_sign"][lperm][:, eperm])
  return slab


# ---------------- glue: deterministic synthetic parameters ----------------
def init_params(key):
  ks = iter(jax.random.split(key, 64))

  def w(shape, fan_in):
    return jax.random.normal(next(ks), shape, jnp.float32) / math.sqrt(fan_in)

  def b(shape):
    return jax.random.normal(next(ks), shape, jnp.float32) * 0.01

  def mlp_params(d_in, d_hidden, d_out):  # weights stored (in, out): y = x @ W + b
    return [w((d_in, d_hidden), d_in), b((1, d_hidden)),
            w((d_hidden, d_out), d_hidden), b((1, d_out))]

  return {
      "c2l_init": jax.random.normal(next(ks), (1, DIM), jnp.float32),
      # l2c_edges_init exists in the module but is dead in the forward pass.
      "l2c_init": jax.random.normal(next(ks), (1, DIM), jnp.float32),
      "l2c_msg_update": mlp_params(DIM, DIM, DIM),
      "l2c_msg_norm": mlp_params(2 * DIM, DIM, DIM),
      "c2l_msg_update": mlp_params(DIM, DIM, DIM),
      "l_readout": mlp_params(DIM, DIM, 1),
      # c_readout is only used on the model-counting path (not exercised here).
      # nn.MultiheadAttention params [wq, wk, wv, bq, bk, bv, wo, bo]:
      "attn": [w((EMBED, EMBED), EMBED), w((EMBED, EMBED), EMBED),
               w((EMBED, EMBED), EMBED),
               b((1, EMBED)), b((1, EMBED)), b((1, EMBED)),
               w((EMBED, EMBED), EMBED), b((1, EMBED))],
      "attn_proj": [w((EMBED, EMBED), EMBED), b((1, EMBED))],
  }


def pack_params(params):
  """Fuse attention chain, pack weights (bf16) and biases (f32) into slabs."""
  lu, ln = params["l2c_msg_update"], params["l2c_msg_norm"]
  cu, lr = params["c2l_msg_update"], params["l_readout"]
  lr_w2_pad = jnp.pad(lr[2], ((0, 0), (0, DIM - lr[2].shape[1])))      # (128,1)->(128,128)
  w128 = jnp.concatenate(
      [lu[0], lu[2], ln[0], ln[2], cu[0], cu[2], lr[0], lr_w2_pad], axis=0)
  assert w128.shape == (W128_ROWS, DIM)

  # seq-len-1 MHA: softmax(1x1)==1 -> MHA(x,x,x) == out_proj(v_proj(x)); wq/wk/bq/bk
  # are mathematically dead.  Fuse v_proj -> out_proj -> attn_proj into one affine map.
  wq, wk, wv, bq, bk, bv, wo, bo = params["attn"]       # wq/wk/bq/bk intentionally unused
  ap_w, ap_b = params["attn_proj"]
  w_attn = wv @ wo @ ap_w
  b_attn = (bv @ wo + bo) @ ap_w + ap_b

  def pad_row(x):
    x = jnp.reshape(x, (1, -1)).astype(jnp.float32)
    return jnp.pad(x, ((0, 0), (0, EMBED - x.shape[1])))

  rows = [lu[1], lu[3], ln[1], ln[3], cu[1], cu[3], lr[1], lr[3],
          b_attn, params["c2l_init"] / DENOM]           # fold 1/sqrt(dim) on host
  bias_slab = jnp.concatenate([pad_row(r) for r in rows], axis=0)
  bias_slab = jnp.pad(bias_slab, ((0, BIAS_ROWS - bias_slab.shape[0]), (0, 0)))

  return w128.astype(jnp.bfloat16), w_attn.astype(jnp.bfloat16), bias_slab


# ---------------- pure-JAX reference (original edge order, unfused attention) -------
def nsnet_reference(dense, params):
  f32 = jnp.float32
  q = lambda w: w.astype(jnp.bfloat16).astype(f32)      # mirror the kernel's bf16 weights

  def linear(x, w, b): return x @ q(w) + b
  def mlp(x, p): return linear(jnp.maximum(linear(x, p[0], p[1]), 0.0), p[2], p[3])

  wq, wk, wv, bq, bk, bv, wo, bo = params["attn"]
  ap_w, ap_b = params["attn_proj"]
  a_c2l, a_aggr = dense["a_c2l"], dense["a_aggr"]
  m_lse, a_sign = dense["m_lse"], dense["a_sign"]

  c2l = jnp.broadcast_to(params["c2l_init"] / DENOM, (NUM_EDGES, DIM))
  for _ in range(N_ROUNDS):
    msg = a_c2l @ c2l
    new = mlp(msg, params["l2c_msg_update"])
    v2c = new.reshape(NUM_EDGES // 2, 2 * DIM)
    for _ in range(N_ATTN_ROUNDS):
      v2c = linear(linear(v2c, wv, bv), wo, bo)          # MHA with L=1
      v2c = linear(v2c, ap_w, ap_b)                      # attn_proj
    p_half, n_half = v2c[:, :DIM], v2c[:, DIM:]
    inv = jnp.concatenate([n_half, p_half], axis=1).reshape(NUM_EDGES, DIM)
    l2c = mlp(jnp.concatenate([new, inv], axis=1), params["l2c_msg_norm"])
    aggr = a_aggr @ l2c
    c = jnp.max(aggr, axis=0, keepdims=True)
    s = m_lse @ jnp.exp(aggr - c)
    l2c_msg = jnp.log(jnp.maximum(s, jnp.finfo(f32).tiny)) + c
    c2l = mlp(l2c_msg, params["c2l_msg_update"])
  l_logit = mlp(a_sign @ c2l, params["l_readout"])
  return jax.nn.softmax(l_logit.reshape(-1, 2), axis=1)


if __name__ == "__main__":
  key = jax.random.PRNGKey(0)
  k_params, k_graphs = jax.random.split(key)

  params = init_params(k_params)
  w128, wattn, bias_slab = pack_params(params)

  BATCH = 4
  dense_graphs = [build_graph_dense(k) for k in jax.random.split(k_graphs, BATCH)]
  graph_slabs = jnp.stack([pack_graph(d) for d in dense_graphs])

  out = jax.block_until_ready(nsnet_forward(graph_slabs, w128, wattn, bias_slab))

  assert out.shape == (BATCH, N_VARS, 2), out.shape
  assert bool(jnp.all(jnp.isfinite(out)))
  assert bool(jnp.allclose(jnp.sum(out, axis=-1), 1.0, atol=1e-5))

  ref = jnp.stack([nsnet_reference(d, params) for d in dense_graphs])
  assert bool(jnp.allclose(out, ref, atol=5e-2)), (out, ref)
  print("KERNEL_OK")
</pallas_src>

<mosaic_0001>
module attributes {stable_mosaic.version = 11 : i64} {
  func.func @_nsnet_kernel(%arg0: i32, %arg1: memref<1x64x32xf32, #tpu.memory_space<vmem>>, %arg2: memref<1152x128xbf16, #tpu.memory_space<vmem>>, %arg3: memref<256x256xbf16, #tpu.memory_space<vmem>>, %arg4: memref<16x256xf32, #tpu.memory_space<vmem>>, %arg5: memref<1x4x2xf32, #tpu.memory_space<vmem>>) attributes {dimension_semantics = [#tpu.dimension_semantics<parallel>], iteration_bounds = array<i64: 4>, scalar_prefetch = 0 : i64, scratch_operands = 0 : i64, tpu.core_type = #tpu.core_type<tc>, window_params = [{transform_indices = @transform_0, window_bounds = array<i64: 1, 64, 32>}, {pipeline_mode = #tpu.pipeline_mode<synchronous>, transform_indices = @transform_1, window_bounds = array<i64: 1152, 128>}, {pipeline_mode = #tpu.pipeline_mode<synchronous>, transform_indices = @transform_2, window_bounds = array<i64: 256, 256>}, {pipeline_mode = #tpu.pipeline_mode<synchronous>, transform_indices = @transform_3, window_bounds = array<i64: 16, 256>}, {transform_indices = @transform_4, window_bounds = array<i64: 1, 4, 2>}]} {
    %c0 = arith.constant 0 : index
    %c0_0 = arith.constant 0 : index
    %c0_1 = arith.constant 0 : index
    %0 = vector.load %arg1[%c0, %c0_0, %c0_1] : memref<1x64x32xf32, #tpu.memory_space<vmem>>, vector<1x64x32xf32>
    %1 = vector.shape_cast %0 : vector<1x64x32xf32> to vector<64x32xf32>
    %2 = vector.extract_strided_slice %1 {offsets = [0, 0], sizes = [16, 16], strides = [1, 1]} : vector<64x32xf32> to vector<16x16xf32>
    %3 = vector.extract_strided_slice %1 {offsets = [16, 0], sizes = [24, 16], strides = [1, 1]} : vector<64x32xf32> to vector<24x16xf32>
    %4 = vector.extract_strided_slice %1 {offsets = [40, 0], sizes = [16, 24], strides = [1, 1]} : vector<64x32xf32> to vector<16x24xf32>
    %5 = vector.extract_strided_slice %1 {offsets = [56, 0], sizes = [8, 16], strides = [1, 1]} : vector<64x32xf32> to vector<8x16xf32>
    %c9 = arith.constant 9 : index
    %c0_2 = arith.constant 0 : index
    %6 = vector.load %arg4[%c9, %c0_2] : memref<16x256xf32, #tpu.memory_space<vmem>>, vector<1x128xf32>
    %7 = vector.shape_cast %6 : vector<1x128xf32> to vector<1x128xf32>
    %8 = vector.broadcast %7 : vector<1x128xf32> to vector<16x128xf32>
    %cst = arith.constant dense<0.000000e+00> : vector<16x128xf32>
    %9 = tpu.matmul %2, %8, %cst {dimension_numbers = #tpu.dot_dimension_numbers<[1], [0], [0], [1], [0, 0, 1, 1], [], []>} : vector<16x16xf32>, vector<16x128xf32>, vector<16x128xf32> -> vector<16x128xf32>
    %c0_3 = arith.constant 0 : index
    %c0_4 = arith.constant 0 : index
    %10 = vector.load %arg2[%c0_3, %c0_4] : memref<1152x128xbf16, #tpu.memory_space<vmem>>, vector<128x128xbf16>
    %11 = arith.truncf %9 : vector<16x128xf32> to vector<16x128xbf16>
    %cst_5 = arith.constant dense<0.000000e+00> : vector<16x128xf32>
    %12 = tpu.matmul %11, %10, %cst_5 {dimension_numbers = #tpu.dot_dimension_numbers<[1], [0], [0], [1], [0, 0, 1, 1], [], []>} : vector<16x128xbf16>, vector<128x128xbf16>, vector<16x128xf32> -> vector<16x128xf32>
    %c0_6 = arith.constant 0 : index
    %c0_7 = arith.constant 0 : index
    %13 = vector.load %arg4[%c0_6, %c0_7] : memref<16x256xf32, #tpu.memory_space<vmem>>, vector<1x128xf32>
    %14 = vector.broadcast %13 : vector<1x128xf32> to vector<16x128xf32>
    %15 = arith.addf %12, %14 : vector<16x128xf32>
    %cst_8 = arith.constant 0.000000e+00 : f32
    %16 = vector.broadcast %cst_8 : f32 to vector<16x128xf32>
    %17 = arith.maximumf %15, %16 : vector<16x128xf32>
    %c128 = arith.constant 128 : index
    %c0_9 = arith.constant 0 : index
    %18 = vector.load %arg2[%c128, %c0_9] : memref<1152x128xbf16, #tpu.memory_space<vmem>>, vector<128x128xbf16>
    %19 = arith.truncf %17 : vector<16x128xf32> to vector<16x128xbf16>
    %cst_10 = arith.constant dense<0.000000e+00> : vector<16x128xf32>
    %20 = tpu.matmul %19, %18, %cst_10 {dimension_numbers = #tpu.dot_dimension_numbers<[1], [0], [0], [1], [0, 0, 1, 1], [], []>} : vector<16x128xbf16>, vector<128x128xbf16>, vector<16x128xf32> -> vector<16x128xf32>
    %c1 = arith.constant 1 : index
    %c0_11 = arith.constant 0 : index
    %21 = vector.load %arg4[%c1, %c0_11] : memref<16x256xf32, #tpu.memory_space<vmem>>, vector<1x128xf32>
    %22 = vector.broadcast %21 : vector<1x128xf32> to vector<16x128xf32>
    %23 = arith.addf %20, %22 : vector<16x128xf32>
    %24 = vector.extract_strided_slice %23 {offsets = [0, 0], sizes = [8, 128], strides = [1, 1]} : vector<16x128xf32> to vector<8x128xf32>
    %25 = vector.extract_strided_slice %23 {offsets = [8, 0], sizes = [8, 128], strides = [1, 1]} : vector<16x128xf32> to vector<8x128xf32>
    %26 = tpu.concatenate %24, %25 in 1 : vector<8x128xf32>, vector<8x128xf32> -> vector<8x256xf32>
    %c0_12 = arith.constant 0 : index
    %c0_13 = arith.constant 0 : index
    %27 = vector.load %arg3[%c0_12, %c0_13] : memref<256x256xbf16, #tpu.memory_space<vmem>>, vector<256x256xbf16>
    %28 = arith.truncf %26 : vector<8x256xf32> to vector<8x256xbf16>
    %cst_14 = arith.constant dense<0.000000e+00> : vector<8x256xf32>
    %29 = tpu.matmul %28, %27, %cst_14 {dimension_numbers = #tpu.dot_dimension_numbers<[1], [0], [0], [1], [0, 0, 1, 1], [], []>} : vector<8x256xbf16>, vector<256x256xbf16>, vector<8x256xf32> -> vector<8x256xf32>
    %c8 = arith.constant 8 : index
    %c0_15 = arith.constant 0 : index
    %30 = vector.load %arg4[%c8, %c0_15] : memref<16x256xf32, #tpu.memory_space<vmem>>, vector<1x256xf32>
    %31 = vector.broadcast %30 : vector<1x256xf32> to vector<8x256xf32>
    %32 = arith.addf %29, %31 : vector<8x256xf32>
    %33 = vector.extract_strided_slice %32 {offsets = [0, 0], sizes = [8, 128], strides = [1, 1]} : vector<8x256xf32> to vector<8x128xf32>
    %34 = vector.extract_strided_slice %32 {offsets = [0, 128], sizes = [8, 128], strides = [1, 1]} : vector<8x256xf32> to vector<8x128xf32>
    %35 = tpu.concatenate %34, %33 in 0 : vector<8x128xf32>, vector<8x128xf32> -> vector<16x128xf32>
    %36 = tpu.concatenate %23, %35 in 1 : vector<16x128xf32>, vector<16x128xf32> -> vector<16x256xf32>
    %c256 = arith.constant 256 : index
    %c0_16 = arith.constant 0 : index
    %37 = vector.load %arg2[%c256, %c0_16] : memref<1152x128xbf16, #tpu.memory_space<vmem>>, vector<256x128xbf16>
    %38 = arith.truncf %36 : vector<16x256xf32> to vector<16x256xbf16>
    %cst_17 = arith.constant dense<0.000000e+00> : vector<16x128xf32>
    %39 = tpu.matmul %38, %37, %cst_17 {dimension_numbers = #tpu.dot_dimension_numbers<[1], [0], [0], [1], [0, 0, 1, 1], [], []>} : vector<16x256xbf16>, vector<256x128xbf16>, vector<16x128xf32> -> vector<16x128xf32>
    %c2 = arith.constant 2 : index
    %c0_18 = arith.constant 0 : index
    %40 = vector.load %arg4[%c2, %c0_18] : memref<16x256xf32, #tpu.memory_space<vmem>>, vector<1x128xf32>
    %41 = vector.broadcast %40 : vector<1x128xf32> to vector<16x128xf32>
    %42 = arith.addf %39, %41 : vector<16x128xf32>
    %cst_19 = arith.constant 0.000000e+00 : f32
    %43 = vector.broadcast %cst_19 : f32 to vector<16x128xf32>
    %44 = arith.maximumf %42, %43 : vector<16x128xf32>
    %c512 = arith.constant 512 : index
    %c0_20 = arith.constant 0 : index
    %45 = vector.load %arg2[%c512, %c0_20] : memref<1152x128xbf16, #tpu.memory_space<vmem>>, vector<128x128xbf16>
    %46 = arith.truncf %44 : vector<16x128xf32> to vector<16x128xbf16>
    %cst_21 = arith.constant dense<0.000000e+00> : vector<16x128xf32>
    %47 = tpu.matmul %46, %45, %cst_21 {dimension_numbers = #tpu.dot_dimension_numbers<[1], [0], [0], [1], [0, 0, 1, 1], [], []>} : vector<16x128xbf16>, vector<128x128xbf16>, vector<16x128xf32> -> vector<16x128xf32>
    %c3 = arith.constant 3 : index
    %c0_22 = arith.constant 0 : index
    %48 = vector.load %arg4[%c3, %c0_22] : memref<16x256xf32, #tpu.memory_space<vmem>>, vector<1x128xf32>
    %49 = vector.broadcast %48 : vector<1x128xf32> to vector<16x128xf32>
    %50 = arith.addf %47, %49 : vector<16x128xf32>
    %cst_23 = arith.constant dense<0.000000e+00> : vector<24x128xf32>
    %51 = tpu.matmul %3, %50, %cst_23 {dimension_numbers = #tpu.dot_dimension_numbers<[1], [0], [0], [1], [0, 0, 1, 1], [], []>} : vector<24x16xf32>, vector<16x128xf32>, vector<24x128xf32> -> vector<24x128xf32>
    %cst_24 = arith.constant dense<0xFF800000> : vector<128xf32>
    %52 = vector.multi_reduction <maximumf>, %51, %cst_24 [0] : vector<24x128xf32> to vector<128xf32>
    %53 = vector.shape_cast %52 : vector<128xf32> to vector<1x128xf32>
    %54 = vector.broadcast %53 : vector<1x128xf32> to vector<24x128xf32>
    %55 = arith.subf %51, %54 : vector<24x128xf32>
    %56 = math.exp %55 : vector<24x128xf32>
    %cst_25 = arith.constant dense<0.000000e+00> : vector<16x128xf32>
    %57 = tpu.matmul %4, %56, %cst_25 {dimension_numbers = #tpu.dot_dimension_numbers<[1], [0], [0], [1], [0, 0, 1, 1], [], []>} : vector<16x24xf32>, vector<24x128xf32>, vector<16x128xf32> -> vector<16x128xf32>
    %cst_26 = arith.constant 1.17549435E-38 : f32
    %58 = vector.broadcast %cst_26 : f32 to vector<16x128xf32>
    %59 = arith.maximumf %57, %58 : vector<16x128xf32>
    %60 = math.log %59 : vector<16x128xf32>
    %61 = vector.broadcast %53 : vector<1x128xf32> to vector<16x128xf32>
    %62 = arith.addf %60, %61 : vector<16x128xf32>
    %c640 = arith.constant 640 : index
    %c0_27 = arith.constant 0 : index
    %63 = vector.load %arg2[%c640, %c0_27] : memref<1152x128xbf16, #tpu.memory_space<vmem>>, vector<128x128xbf16>
    %64 = arith.truncf %62 : vector<16x128xf32> to vector<16x128xbf16>
    %cst_28 = arith.constant dense<0.000000e+00> : vector<16x128xf32>
    %65 = tpu.matmul %64, %63, %cst_28 {dimension_numbers = #tpu.dot_dimension_numbers<[1], [0], [0], [1], [0, 0, 1, 1], [], []>} : vector<16x128xbf16>, vector<128x128xbf16>, vector<16x128xf32> -> vector<16x128xf32>
    %c4 = arith.constant 4 : index
    %c0_29 = arith.constant 0 : index
    %66 = vector.load %arg4[%c4, %c0_29] : memref<16x256xf32, #tpu.memory_space<vmem>>, vector<1x128xf32>
    %67 = vector.broadcast %66 : vector<1x128xf32> to vector<16x128xf32>
    %68 = arith.addf %65, %67 : vector<16x128xf32>
    %cst_30 = arith.constant 0.000000e+00 : f32
    %69 = vector.broadcast %cst_30 : f32 to vector<16x128xf32>
    %70 = arith.maximumf %68, %69 : vector<16x128xf32>
    %c768 = arith.constant 768 : index
    %c0_31 = arith.constant 0 : index
    %71 = vector.load %arg2[%c768, %c0_31] : memref<1152x128xbf16, #tpu.memory_space<vmem>>, vector<128x128xbf16>
    %72 = arith.truncf %70 : vector<16x128xf32> to vector<16x128xbf16>
    %cst_32 = arith.constant dense<0.000000e+00> : vector<16x128xf32>
    %73 = tpu.matmul %72, %71, %cst_32 {dimension_numbers = #tpu.dot_dimension_numbers<[1], [0], [0], [1], [0, 0, 1, 1], [], []>} : vector<16x128xbf16>, vector<128x128xbf16>, vector<16x128xf32> -> vector<16x128xf32>
    %c5 = arith.constant 5 : index
    %c0_33 = arith.constant 0 : index
    %74 = vector.load %arg4[%c5, %c0_33] : memref<16x256xf32, #tpu.memory_space<vmem>>, vector<1x128xf32>
    %75 = vector.broadcast %74 : vector<1x128xf32> to vector<16x128xf32>
    %76 = arith.addf %73, %75 : vector<16x128xf32>
    %cst_34 = arith.constant dense<0.000000e+00> : vector<16x128xf32>
    %77 = tpu.matmul %2, %76, %cst_34 {dimension_numbers = #tpu.dot_dimension_numbers<[1], [0], [0], [1], [0, 0, 1, 1], [], []>} : vector<16x16xf32>, vector<16x128xf32>, vector<16x128xf32> -> vector<16x128xf32>
    %c0_35 = arith.constant 0 : index
    %c0_36 = arith.constant 0 : index
    %78 = vector.load %arg2[%c0_35, %c0_36] : memref<1152x128xbf16, #tpu.memory_space<vmem>>, vector<128x128xbf16>
    %79 = arith.truncf %77 : vector<16x128xf32> to vector<16x128xbf16>
    %cst_37 = arith.constant dense<0.000000e+00> : vector<16x128xf32>
    %80 = tpu.matmul %79, %78, %cst_37 {dimension_numbers = #tpu.dot_dimension_numbers<[1], [0], [0], [1], [0, 0, 1, 1], [], []>} : vector<16x128xbf16>, vector<128x128xbf16>, vector<16x128xf32> -> vector<16x128xf32>
    %c0_38 = arith.constant 0 : index
    %c0_39 = arith.constant 0 : index
    %81 = vector.load %arg4[%c0_38, %c0_39] : memref<16x256xf32, #tpu.memory_space<vmem>>, vector<1x128xf32>
    %82 = vector.broadcast %81 : vector<1x128xf32> to vector<16x128xf32>
    %83 = arith.addf %80, %82 : vector<16x128xf32>
    %cst_40 = arith.constant 0.000000e+00 : f32
    %84 = vector.broadcast %cst_40 : f32 to vector<16x128xf32>
    %85 = arith.maximumf %83, %84 : vector<16x128xf32>
    %c128_41 = arith.constant 128 : index
    %c0_42 = arith.constant 0 : index
    %86 = vector.load %arg2[%c128_41, %c0_42] : memref<1152x128xbf16, #tpu.memory_space<vmem>>, vector<128x128xbf16>
    %87 = arith.truncf %85 : vector<16x128xf32> to vector<16x128xbf16>
    %cst_43 = arith.constant dense<0.000000e+00> : vector<16x128xf32>
    %88 = tpu.matmul %87, %86, %cst_43 {dimension_numbers = #tpu.dot_dimension_numbers<[1], [0], [0], [1], [0, 0, 1, 1], [], []>} : vector<16x128xbf16>, vector<128x128xbf16>, vector<16x128xf32> -> vector<16x128xf32>
    %c1_44 = arith.constant 1 : index
    %c0_45 = arith.constant 0 : index
    %89 = vector.load %arg4[%c1_44, %c0_45] : memref<16x256xf32, #tpu.memory_space<vmem>>, vector<1x128xf32>
    %90 = vector.broadcast %89 : vector<1x128xf32> to vector<16x128xf32>
    %91 = arith.addf %88, %90 : vector<16x128xf32>
    %92 = vector.extract_strided_slice %91 {offsets = [0, 0], sizes = [8, 128], strides = [1, 1]} : vector<16x128xf32> to vector<8x128xf32>
    %93 = vector.extract_strided_slice %91 {offsets = [8, 0], sizes = [8, 128], strides = [1, 1]} : vector<16x128xf32> to vector<8x128xf32>
    %94 = tpu.concatenate %92, %93 in 1 : vector<8x128xf32>, vector<8x128xf32> -> vector<8x256xf32>
    %c0_46 = arith.constant 0 : index
    %c0_47 = arith.constant 0 : index
    %95 = vector.load %arg3[%c0_46, %c0_47] : memref<256x256xbf16, #tpu.memory_space<vmem>>, vector<256x256xbf16>
    %96 = arith.truncf %94 : vector<8x256xf32> to vector<8x256xbf16>
    %cst_48 = arith.constant dense<0.000000e+00> : vector<8x256xf32>
    %97 = tpu.matmul %96, %95, %cst_48 {dimension_numbers = #tpu.dot_dimension_numbers<[1], [0], [0], [1], [0, 0, 1, 1], [], []>} : vector<8x256xbf16>, vector<256x256xbf16>, vector<8x256xf32> -> vector<8x256xf32>
    %c8_49 = arith.constant 8 : index
    %c0_50 = arith.constant 0 : index
    %98 = vector.load %arg4[%c8_49, %c0_50] : memref<16x256xf32, #tpu.memory_space<vmem>>, vector<1x256xf32>
    %99 = vector.broadcast %98 : vector<1x256xf32> to vector<8x256xf32>
    %100 = arith.addf %97, %99 : vector<8x256xf32>
    %101 = vector.extract_strided_slice %100 {offsets = [0, 0], sizes = [8, 128], strides = [1, 1]} : vector<8x256xf32> to vector<8x128xf32>
    %102 = vector.extract_strided_slice %100 {offsets = [0, 128], sizes = [8, 128], strides = [1, 1]} : vector<8x256xf32> to vector<8x128xf32>
    %103 = tpu.concatenate %102, %101 in 0 : vector<8x128xf32>, vector<8x128xf32> -> vector<16x128xf32>
    %104 = tpu.concatenate %91, %103 in 1 : vector<16x128xf32>, vector<16x128xf32> -> vector<16x256xf32>
    %c256_51 = arith.constant 256 : index
    %c0_52 = arith.constant 0 : index
    %105 = vector.load %arg2[%c256_51, %c0_52] : memref<1152x128xbf16, #tpu.memory_space<vmem>>, vector<256x128xbf16>
    %106 = arith.truncf %104 : vector<16x256xf32> to vector<16x256xbf16>
    %cst_53 = arith.constant dense<0.000000e+00> : vector<16x128xf32>
    %107 = tpu.matmul %106, %105, %cst_53 {dimension_numbers = #tpu.dot_dimension_numbers<[1], [0], [0], [1], [0, 0, 1, 1], [], []>} : vector<16x256xbf16>, vector<256x128xbf16>, vector<16x128xf32> -> vector<16x128xf32>
    %c2_54 = arith.constant 2 : index
    %c0_55 = arith.constant 0 : index
    %108 = vector.load %arg4[%c2_54, %c0_55] : memref<16x256xf32, #tpu.memory_space<vmem>>, vector<1x128xf32>
    %109 = vector.broadcast %108 : vector<1x128xf32> to vector<16x128xf32>
    %110 = arith.addf %107, %109 : vector<16x128xf32>
    %cst_56 = arith.constant 0.000000e+00 : f32
    %111 = vector.broadcast %cst_56 : f32 to vector<16x128xf32>
    %112 = arith.maximumf %110, %111 : vector<16x128xf32>
    %c512_57 = arith.constant 512 : index
    %c0_58 = arith.constant 0 : index
    %113 = vector.load %arg2[%c512_57, %c0_58] : memref<1152x128xbf16, #tpu.memory_space<vmem>>, vector<128x128xbf16>
    %114 = arith.truncf %112 : vector<16x128xf32> to vector<16x128xbf16>
    %cst_59 = arith.constant dense<0.000000e+00> : vector<16x128xf32>
    %115 = tpu.matmul %114, %113, %cst_59 {dimension_numbers = #tpu.dot_dimension_numbers<[1], [0], [0], [1], [0, 0, 1, 1], [], []>} : vector<16x128xbf16>, vector<128x128xbf16>, vector<16x128xf32> -> vector<16x128xf32>
    %c3_60 = arith.constant 3 : index
    %c0_61 = arith.constant 0 : index
    %116 = vector.load %arg4[%c3_60, %c0_61] : memref<16x256xf32, #tpu.memory_space<vmem>>, vector<1x128xf32>
    %117 = vector.broadcast %116 : vector<1x128xf32> to vector<16x128xf32>
    %118 = arith.addf %115, %117 : vector<16x128xf32>
    %cst_62 = arith.constant dense<0.000000e+00> : vector<24x128xf32>
    %119 = tpu.matmul %3, %118, %cst_62 {dimension_numbers = #tpu.dot_dimension_numbers<[1], [0], [0], [1], [0, 0, 1, 1], [], []>} : vector<24x16xf32>, vector<16x128xf32>, vector<24x128xf32> -> vector<24x128xf32>
    %cst_63 = arith.constant dense<0xFF800000> : vector<128xf32>
    %120 = vector.multi_reduction <maximumf>, %119, %cst_63 [0] : vector<24x128xf32> to vector<128xf32>
    %121 = vector.shape_cast %120 : vector<128xf32> to vector<1x128xf32>
    %122 = vector.broadcast %121 : vector<1x128xf32> to vector<24x128xf32>
    %123 = arith.subf %119, %122 : vector<24x128xf32>
    %124 = math.exp %123 : vector<24x128xf32>
    %cst_64 = arith.constant dense<0.000000e+00> : vector<16x128xf32>
    %125 = tpu.matmul %4, %124, %cst_64 {dimension_numbers = #tpu.dot_dimension_numbers<[1], [0], [0], [1], [0, 0, 1, 1], [], []>} : vector<16x24xf32>, vector<24x128xf32>, vector<16x128xf32> -> vector<16x128xf32>
    %cst_65 = arith.constant 1.17549435E-38 : f32
    %126 = vector.broadcast %cst_65 : f32 to vector<16x128xf32>
    %127 = arith.maximumf %125, %126 : vector<16x128xf32>
    %128 = math.log %127 : vector<16x128xf32>
    %129 = vector.broadcast %121 : vector<1x128xf32> to vector<16x128xf32>
    %130 = arith.addf %128, %129 : vector<16x128xf32>
    %c640_66 = arith.constant 640 : index
    %c0_67 = arith.constant 0 : index
    %131 = vector.load %arg2[%c640_66, %c0_67] : memref<1152x128xbf16, #tpu.memory_space<vmem>>, vector<128x128xbf16>
    %132 = arith.truncf %130 : vector<16x128xf32> to vector<16x128xbf16>
    %cst_68 = arith.constant dense<0.000000e+00> : vector<16x128xf32>
    %133 = tpu.matmul %132, %131, %cst_68 {dimension_numbers = #tpu.dot_dimension_numbers<[1], [0], [0], [1], [0, 0, 1, 1], [], []>} : vector<16x128xbf16>, vector<128x128xbf16>, vector<16x128xf32> -> vector<16x128xf32>
    %c4_69 = arith.constant 4 : index
    %c0_70 = arith.constant 0 : index
    %134 = vector.load %arg4[%c4_69, %c0_70] : memref<16x256xf32, #tpu.memory_space<vmem>>, vector<1x128xf32>
    %135 = vector.broadcast %134 : vector<1x128xf32> to vector<16x128xf32>
    %136 = arith.addf %133, %135 : vector<16x128xf32>
    %cst_71 = arith.constant 0.000000e+00 : f32
    %137 = vector.broadcast %cst_71 : f32 to vector<16x128xf32>
    %138 = arith.maximumf %136, %137 : vector<16x128xf32>
    %c768_72 = arith.constant 768 : index
    %c0_73 = arith.constant 0 : index
    %139 = vector.load %arg2[%c768_72, %c0_73] : memref<1152x128xbf16, #tpu.memory_space<vmem>>, vector<128x128xbf16>
    %140 = arith.truncf %138 : vector<16x128xf32> to vector<16x128xbf16>
    %cst_74 = arith.constant dense<0.000000e+00> : vector<16x128xf32>
    %141 = tpu.matmul %140, %139, %cst_74 {dimension_numbers = #tpu.dot_dimension_numbers<[1], [0], [0], [1], [0, 0, 1, 1], [], []>} : vector<16x128xbf16>, vector<128x128xbf16>, vector<16x128xf32> -> vector<16x128xf32>
    %c5_75 = arith.constant 5 : index
    %c0_76 = arith.constant 0 : index
    %142 = vector.load %arg4[%c5_75, %c0_76] : memref<16x256xf32, #tpu.memory_space<vmem>>, vector<1x128xf32>
    %143 = vector.broadcast %142 : vector<1x128xf32> to vector<16x128xf32>
    %144 = arith.addf %141, %143 : vector<16x128xf32>
    %cst_77 = arith.constant dense<0.000000e+00> : vector<8x128xf32>
    %145 = tpu.matmul %5, %144, %cst_77 {dimension_numbers = #tpu.dot_dimension_numbers<[1], [0], [0], [1], [0, 0, 1, 1], [], []>} : vector<8x16xf32>, vector<16x128xf32>, vector<8x128xf32> -> vector<8x128xf32>
    %c896 = arith.constant 896 : index
    %c0_78 = arith.constant 0 : index
    %146 = vector.load %arg2[%c896, %c0_78] : memref<1152x128xbf16, #tpu.memory_space<vmem>>, vector<128x128xbf16>
    %147 = arith.truncf %145 : vector<8x128xf32> to vector<8x128xbf16>
    %cst_79 = arith.constant dense<0.000000e+00> : vector<8x128xf32>
    %148 = tpu.matmul %147, %146, %cst_79 {dimension_numbers = #tpu.dot_dimension_numbers<[1], [0], [0], [1], [0, 0, 1, 1], [], []>} : vector<8x128xbf16>, vector<128x128xbf16>, vector<8x128xf32> -> vector<8x128xf32>
    %c6 = arith.constant 6 : index
    %c0_80 = arith.constant 0 : index
    %149 = vector.load %arg4[%c6, %c0_80] : memref<16x256xf32, #tpu.memory_space<vmem>>, vector<1x128xf32>
    %150 = vector.broadcast %149 : vector<1x128xf32> to vector<8x128xf32>
    %151 = arith.addf %148, %150 : vector<8x128xf32>
    %cst_81 = arith.constant 0.000000e+00 : f32
    %152 = vector.broadcast %cst_81 : f32 to vector<8x128xf32>
    %153 = arith.maximumf %151, %152 : vector<8x128xf32>
    %c1024 = arith.constant 1024 : index
    %c0_82 = arith.constant 0 : index
    %154 = vector.load %arg2[%c1024, %c0_82] : memref<1152x128xbf16, #tpu.memory_space<vmem>>, vector<128x128xbf16>
    %155 = arith.truncf %153 : vector<8x128xf32> to vector<8x128xbf16>
    %cst_83 = arith.constant dense<0.000000e+00> : vector<8x128xf32>
    %156 = tpu.matmul %155, %154, %cst_83 {dimension_numbers = #tpu.dot_dimension_numbers<[1], [0], [0], [1], [0, 0, 1, 1], [], []>} : vector<8x128xbf16>, vector<128x128xbf16>, vector<8x128xf32> -> vector<8x128xf32>
    %c7 = arith.constant 7 : index
    %c0_84 = arith.constant 0 : index
    %157 = vector.load %arg4[%c7, %c0_84] : memref<16x256xf32, #tpu.memory_space<vmem>>, vector<1x128xf32>
    %158 = vector.broadcast %157 : vector<1x128xf32> to vector<8x128xf32>
    %159 = arith.addf %156, %158 : vector<8x128xf32>
    %160 = vector.extract_strided_slice %159 {offsets = [0, 0], sizes = [4, 1], strides = [1, 1]} : vector<8x128xf32> to vector<4x1xf32>
    %161 = vector.extract_strided_slice %159 {offsets = [4, 0], sizes = [4, 1], strides = [1, 1]} : vector<8x128xf32> to vector<4x1xf32>
    %162 = arith.maximumf %160, %161 : vector<4x1xf32>
    %163 = arith.subf %160, %162 : vector<4x1xf32>
    %164 = math.exp %163 : vector<4x1xf32>
    %165 = arith.subf %161, %162 : vector<4x1xf32>
    %166 = math.exp %165 : vector<4x1xf32>
    %167 = arith.addf %164, %166 : vector<4x1xf32>
    %168 = arith.divf %164, %167 : vector<4x1xf32>
    %169 = arith.divf %166, %167 : vector<4x1xf32>
    %170 = tpu.concatenate %168, %169 in 1 : vector<4x1xf32>, vector<4x1xf32> -> vector<4x2xf32>
    %c0_85 = arith.constant 0 : index
    %c0_86 = arith.constant 0 : index
    %c0_87 = arith.constant 0 : index
    %171 = vector.load %arg5[%c0_85, %c0_86, %c0_87] : memref<1x4x2xf32, #tpu.memory_space<vmem>>, vector<1x4x2xf32>
    %172 = vector.shape_cast %171 : vector<1x4x2xf32> to vector<4x2xf32>
    %173 = vector.shape_cast %170 : vector<4x2xf32> to vector<1x4x2xf32>
    tpu.vector_store %arg5[%c0_85, %c0_86, %c0_87], %173 {strides = array<i32>} : memref<1x4x2xf32, #tpu.memory_space<vmem>>, vector<1x4x2xf32>,
    return
  }
  func.func @transform_0(%arg0: i32) -> (i32, i32, i32) {
    %c0_i32 = arith.constant 0 : i32
    %c0_i32_0 = arith.constant 0 : i32
    %c0_i32_1 = arith.constant 0 : i32
    return %arg0, %c0_i32, %c0_i32_0 : i32, i32, i32
  }
  func.func @transform_1(%arg0: i32) -> (i32, i32) {
    %c0_i32 = arith.constant 0 : i32
    %c0_i32_0 = arith.constant 0 : i32
    %c0_i32_1 = arith.constant 0 : i32
    return %c0_i32, %c0_i32_0 : i32, i32
  }
  func.func @transform_2(%arg0: i32) -> (i32, i32) {
    %c0_i32 = arith.constant 0 : i32
    %c0_i32_0 = arith.constant 0 : i32
    %c0_i32_1 = arith.constant 0 : i32
    return %c0_i32, %c0_i32_0 : i32, i32
  }
  func.func @transform_3(%arg0: i32) -> (i32, i32) {
    %c0_i32 = arith.constant 0 : i32
    %c0_i32_0 = arith.constant 0 : i32
    %c0_i32_1 = arith.constant 0 : i32
    return %c0_i32, %c0_i32_0 : i32, i32
  }
  func.func @transform_4(%arg0: i32) -> (i32, i32, i32) {
    %c0_i32 = arith.constant 0 : i32
    %c0_i32_0 = arith.constant 0 : i32
    %c0_i32_1 = arith.constant 0 : i32
    return %arg0, %c0_i32, %c0_i32_0 : i32, i32, i32
  }
}

</mosaic_0001>

<llo_original>
// kernel: tpu_custom_call.1
$region0: #{tpu_custom_call.1}
  #allocation0 [shape = 'u32[]', space=smem, size = 0x4, offset = 0x4, fixed_abs, tag = 'smem constant byte address 0x4 - core index']
  #allocation1 [shape = 'u32[72,128]{1,0:T(1,128)}', space=vmem, size = 0x9000, scoped, tag = 'internal scratch']
  %s0 = inlined_call_operand.vmem [shape: f32[4,64,32], index: 0, kind: input, shape index: {}]
  %s1 = inlined_call_operand.hbm [shape: bf16[1152,128], index: 1, kind: input, shape index: {}]
  %s2 = inlined_call_operand.vmem [shape: bf16[256,256], index: 2, kind: input, shape index: {}]
  %s3 = inlined_call_operand.vmem [shape: f32[16,256], index: 3, kind: input, shape index: {}]
  %s4 = inlined_call_operand.vmem [shape: f32[4,4,2], index: 4, kind: output, shape index: {}]
  %s5 = sld [smem:[#allocation0]]
  $region53: #{tpu_custom_call.1} parent=0
    _
  %s7 = ssub.s32 1, %s5
  %s8 = scalar_select 0, %s7, %s5
  $region1: #{tpu_custom_call.1} parent=0
    #allocation2 [shape = 'u8[294912]{0}', space=vmem, size = 0x48000, scoped, tag = 'input window, operand 1, single buffered']
    #allocation3 [shape = 's32[2]{0}', space=sflag, size = 0x8, scoped, tag = 'scoped memory for tpu_custom_call.1']
    %9 = vsyncpa [#allocation3], 0
    loop: start=0, step=1, limit=6
    $region2: #{tpu_custom_call.1} parent=1 // loop_pre_header
      _
    $region3: #{tpu_custom_call.1} parent=1 // loop_header
      %s11 = sphi 0, %s15
      %p12 = scmp.ge.s32.totalorder %s11, 6
      %s21 = sphi 0, %s23
      %s24 = sphi 0, %s21
      %s25 = sphi 0, %s24
      %s41 = sphi 0, %s25
      %s45 = sphi 0, %s45
      %s47 = sphi 0, %s45
      %s48 = sphi 0, %s47
      %s62 = sphi 0, %s48
      %s66 = sphi 0, %s66
      %s68 = sphi 0, %s66
      %s69 = sphi 0, %s68
      %s83 = sphi 0, %s69
      %s87 = sphi 0, %s87
      %s89 = sphi 0, %s87
      %s90 = sphi 0, %s89
      %s104 = sphi 0, %s90
      %s110 = sphi 0, %s112
      %s113 = sphi 0, %s110
      %s114 = sphi 0, %s113
      %s130 = sphi 0, %s114
    $region4: #{tpu_custom_call.1} parent=1 // loop_header_branch
      %14 = sbr.rel (%p12) target = $region8
    $region5: #{tpu_custom_call.1} parent=1 // loop_body
      %s16 = ssub.s32 %s11, 1
      %s17 = ssub.s32 %s11, 2
      %s18 = sadd.s32 %s11, 1
      %s19 = ssub.s32 %s11, %s18
      %p20 = scmp.eq.s32.totalorder %s19, 0
      %s22 = sadd.s32 %s21, 1
      %s23 = scalar_select %p20, %s21, %s22
      %p26 = pneg %p20
      %p27 = scmp.eq.s32.totalorder %s11, 3
      %p28 = por %p26, %p27
      %p29 = scmp.ne.s32.totalorder %s21, %s24
      %p30 = scmp.eq.s32.totalorder %s11, 0
      %p31 = por %p29, %p30
      %p32 = scmp.ne.s32.totalorder %s21, %s24
      %p33 = scmp.eq.s32.totalorder %s16, 3
      %p34 = por %p32, %p33
      %p35 = scmp.ne.s32.totalorder %s24, %s25
      %p36 = scmp.eq.s32.totalorder %s16, 0
      %p37 = por %p35, %p36
      %p38 = scmp.ne.s32.totalorder %s24, %s25
      %p39 = scmp.eq.s32.totalorder %s17, 3
      %p40 = por %p38, %p39
      %p42 = scmp.ne.s32.totalorder %s25, %s41
      %p43 = scmp.eq.s32.totalorder %s17, 0
      %p44 = por %p42, %p43
      %s46 = sadd.s32 %s45, 1
      %p49 = scmp.eq.s32.totalorder %s11, 3
      %p50 = scmp.ne.s32.totalorder %s45, %s47
      %p51 = scmp.eq.s32.totalorder %s11, 0
      %p52 = por %p50, %p51
      %p53 = scmp.ne.s32.totalorder %s45, %s47
      %p54 = scmp.eq.s32.totalorder %s16, 3
      %p55 = por %p53, %p54
      %p56 = scmp.ne.s32.totalorder %s47, %s48
      %p57 = scmp.eq.s32.totalorder %s16, 0
      %p58 = por %p56, %p57
      %p59 = scmp.ne.s32.totalorder %s47, %s48
      %p60 = scmp.eq.s32.totalorder %s17, 3
      %p61 = por %p59, %p60
      %p63 = scmp.ne.s32.totalorder %s48, %s62
      %p64 = scmp.eq.s32.totalorder %s17, 0
      %p65 = por %p63, %p64
      %s67 = sadd.s32 %s66, 1
      %p70 = scmp.eq.s32.totalorder %s11, 3
      %p71 = scmp.ne.s32.totalorder %s66, %s68
      %p72 = scmp.eq.s32.totalorder %s11, 0
      %p73 = por %p71, %p72
      %p74 = scmp.ne.s32.totalorder %s66, %s68
      %p75 = scmp.eq.s32.totalorder %s16, 3
      %p76 = por %p74, %p75
      %p77 = scmp.ne.s32.totalorder %s68, %s69
      %p78 = scmp.eq.s32.totalorder %s16, 0
      %p79 = por %p77, %p78
      %p80 = scmp.ne.s32.totalorder %s68, %s69
      %p81 = scmp.eq.s32.totalorder %s17, 3
      %p82 = por %p80, %p81
      %p84 = scmp.ne.s32.totalorder %s69, %s83
      %p85 = scmp.eq.s32.totalorder %s17, 0
      %p86 = por %p84, %p85
      %s88 = sadd.s32 %s87, 1
      %p91 = scmp.eq.s32.totalorder %s11, 3
      %p92 = scmp.ne.s32.totalorder %s87, %s89
      %p93 = scmp.eq.s32.totalorder %s11, 0
      %p94 = por %p92, %p93
      %p95 = scmp.ne.s32.totalorder %s87, %s89
      %p96 = scmp.eq.s32.totalorder %s16, 3
      %p97 = por %p95, %p96
      %p98 = scmp.ne.s32.totalorder %s89, %s90
      %p99 = scmp.eq.s32.totalorder %s16, 0
      %p100 = por %p98, %p99
      %p101 = scmp.ne.s32.totalorder %s89, %s90
      %p102 = scmp.eq.s32.totalorder %s17, 3
      %p103 = por %p101, %p102
      %p105 = scmp.ne.s32.totalorder %s90, %s104
      %p106 = scmp.eq.s32.totalorder %s17, 0
      %p107 = por %p105, %p106
      %s108 = ssub.s32 %s11, %s18
      %p109 = scmp.eq.s32.totalorder %s108, 0
      %s111 = sadd.s32 %s110, 1
      %s112 = scalar_select %p109, %s110, %s111
      %p115 = pneg %p109
      %p116 = scmp.eq.s32.totalorder %s11, 3
      %p117 = por %p115, %p116
      %p118 = scmp.ne.s32.totalorder %s110, %s113
      %p119 = scmp.eq.s32.totalorder %s11, 0
      %p120 = por %p118, %p119
      %p121 = scmp.ne.s32.totalorder %s110, %s113
      %p122 = scmp.eq.s32.totalorder %s16, 3
      %p123 = por %p121, %p122
      %p124 = scmp.ne.s32.totalorder %s113, %s114
      %p125 = scmp.eq.s32.totalorder %s16, 0
      %p126 = por %p124, %p125
      %p127 = scmp.ne.s32.totalorder %s113, %s114
      %p128 = scmp.eq.s32.totalorder %s17, 3
      %p129 = por %p127, %p128
      %p131 = scmp.ne.s32.totalorder %s114, %s130
      %p132 = scmp.eq.s32.totalorder %s17, 0
      %p133 = por %p131, %p132
      %p134 = scmp.le.s32.totalorder 1, %s11
      %p135 = scmp.lt.s32.totalorder %s11, 5
      %p136 = pnand %p134, %p135
      %p137 = pneg %p136
      // Predicated region
      $region9: #{tpu_custom_call.1} parent=5 // pred_check
        _
      $region10: #{tpu_custom_call.1} parent=5 // pred_check_branch
        %139 = sbr.rel (%p136) target = $region12
      $region11: #{tpu_custom_call.1} parent=5 // pred_region
        %s140 = ssub.s32 %s11, 1
        // Predicated region
        $region13: #{tpu_custom_call.1} parent=11 // pred_check
          %p141 = pneg %p58
        $region14: #{tpu_custom_call.1} parent=11 // pred_check_branch
          %143 = sbr.rel (%p141) target = $region16
        $region15: #{tpu_custom_call.1} parent=11 // pred_region
          %145 = vsyncadd [#allocation3], 0
          %s146 = sshll.u32 %s1, 4
          %s147 = int_to_ptr.hbm [resolvable:$true] %s146
          %s148 = sshll.u32 [#allocation2], 4
          %s149 = int_to_ptr.vmem [resolvable:$true] %s148
          %154 = dma.hbm_to_vmem [thread:$0]  %s147, 9216, %s149, [#allocation3], 64, 64, 4
        $region16: #{tpu_custom_call.1} parent=11 // pred_fallthru
          _
        // Predicated region
        $region17: #{tpu_custom_call.1} parent=11 // pred_check
          %p155 = pneg %p79
        $region18: #{tpu_custom_call.1} parent=11 // pred_check_branch
          %157 = sbr.rel (%p155) target = $region20
        $region19: #{tpu_custom_call.1} parent=11 // pred_region
          _
        $region20: #{tpu_custom_call.1} parent=11 // pred_fallthru
          _
        // Predicated region
        $region21: #{tpu_custom_call.1} parent=11 // pred_check
          %p158 = pneg %p100
        $region22: #{tpu_custom_call.1} parent=11 // pred_check_branch
          %160 = sbr.rel (%p158) target = $region24
        $region23: #{tpu_custom_call.1} parent=11 // pred_region
          _
        $region24: #{tpu_custom_call.1} parent=11 // pred_fallthru
          _
      $region12: #{tpu_custom_call.1} parent=5 // pred_fallthru
        _
      %p161 = scmp.lt.s32.totalorder %s11, 4
      // Predicated region
      $region25: #{tpu_custom_call.1} parent=5 // pred_check
        %p162 = pneg %p161
      $region26: #{tpu_custom_call.1} parent=5 // pred_check_branch
        %164 = sbr.rel (%p162) target = $region28
      $region27: #{tpu_custom_call.1} parent=5 // pred_region
        // Predicated region
        $region29: #{tpu_custom_call.1} parent=27 // pred_check
          %p165 = pneg %p31
        $region30: #{tpu_custom_call.1} parent=27 // pred_check_branch
          %167 = sbr.rel (%p165) target = $region32
        $region31: #{tpu_custom_call.1} parent=27 // pred_region
          %p168 = scmp.lt.s32.totalorder %s11, 3
          %s169 = scalar_select %p168, %s11, 3
          %s170 = smul.addr %s169, 8
          %s171 = smul.addr %s170, 8
          %s172 = scalar_lea.vmem %s0, %s171
        $region32: #{tpu_custom_call.1} parent=27 // pred_fallthru
          _
      $region28: #{tpu_custom_call.1} parent=5 // pred_fallthru
        _
      %p173 = scmp.le.s32.totalorder 1, %s11
      %p174 = scmp.lt.s32.totalorder %s11, 5
      %p175 = pnand %p173, %p174
      %p176 = pneg %p175
      // Predicated region
      $region33: #{tpu_custom_call.1} parent=5 // pred_check
        _
      $region34: #{tpu_custom_call.1} parent=5 // pred_check_branch
        %178 = sbr.rel (%p175) target = $region36
      $region35: #{tpu_custom_call.1} parent=5 // pred_region
        %s179 = ssub.s32 %s11, 1
        // Predicated region
        $region37: #{tpu_custom_call.1} parent=35 // pred_check
          %p180 = pneg %p58
        $region38: #{tpu_custom_call.1} parent=35 // pred_check_branch
          %182 = sbr.rel (%p180) target = $region40
        $region39: #{tpu_custom_call.1} parent=35 // pred_region
          %184 = dma.done [#allocation3], 9216
        $region40: #{tpu_custom_call.1} parent=35 // pred_fallthru
          _
        %p185 = scmp.lt.s32.totalorder %s16, 3
        %s186 = scalar_select %p185, %s16, 3
        %s187 = smul.addr %s186, 8
        %s188 = smul.addr %s187, 8
        %s189 = scalar_lea.vmem %s0, %s188
        %p190 = pneg %p37
        %p191 = pneg %p34
        %p192 = pneg %p58
        %p193 = pneg %p55
        %p194 = pneg %p79
        %p195 = pneg %p76
        %p196 = pneg %p100
        %p197 = pneg %p97
        %p198 = pneg %p126
        %p199 = pneg %p123
        %p200 = scmp.lt.s32.totalorder %s16, 3
        %s201 = scalar_select %p200, %s16, 3
        %s202 = smul.addr %s201, 4
        %s203 = scalar_lea.vmem %s4, %s202
        %p204 = scmp.lt.s32.totalorder %s16, 3
        %s205 = scalar_select %p204, %s16, 3
        %s206 = smul.addr %s205, 8
        %s207 = smul.addr %s206, 8
        %s208 = scalar_lea.vmem %s0, %s207
        %p209 = scmp.lt.s32.totalorder %s16, 3
        %s210 = scalar_select %p209, %s16, 3
        %s211 = smul.addr %s210, 4
        %s212 = scalar_lea.vmem %s4, %s211
        %v213 = vld [vmem:[%s208] sm:$0xff]
        %v214 = vld [vmem:[%s208 + $0x8] sm:$0xff]
        %v215 = vld [vmem:[%s208 + $0x10] sm:$0xff]
        %v216 = vld [vmem:[%s208 + $0x18] sm:$0xff]
        %v217 = vld [vmem:[%s208 + $0x20] sm:$0xff]
        %v218 = vld [vmem:[%s208 + $0x28] sm:$0xff]
        %v219 = vld [vmem:[%s208 + $0x30] sm:$0xff]
        %v220 = vld [vmem:[%s208 + $0x38] sm:$0xff]
        %v221 = vld [vmem:[%s3 + $0x11] ss:$0 sm:$0xff]
        %vm222 = vcmask 130048
        %v224 = vsel %vm222, %v213, 0
        %v227 = vsel %vm222, %v214, 0
        %229 = vmatpush.msra.mxu0 0.0
        %230 = vmatpush.msra.mxu0 0.0
        %231 = vmatpush.msra.mxu0 0.0
        %232 = vmatpush.msra.mxu0 0.0
        %233 = vmatpush.msra.mxu0 0.0
        %234 = vmatpush.msra.mxu0 0.0
        %235 = vmatpush.msra.mxu0 0.0
        %236 = vmatpush.msra.mxu0 0.0
        %237 = vmatpush.msra.mxu0 0.0
        %238 = vmatpush.msra.mxu0 0.0
        %239 = vmatpush.msra.mxu0 0.0
        %240 = vmatpush.msra.mxu0 0.0
        %241 = vmatpush.msra.mxu0 0.0
        %242 = vmatpush.msra.mxu0 0.0
        %243 = vmatpush.msra.mxu0 %v221
        %244 = vmatpush.msra.mxu0 %v221
        %245 = vmatmul.f32.gmra.mxu0 %v224
        %v246 = vpop.f32.mrf.mxu0
        %v247 = vadd.f32 0.0, %v246
        %248 = vmatmul.f32.gmra.mxu0 %v227
        %v249 = vpop.f32.mrf.mxu0
        %v250 = vadd.f32 0.0, %v249
        %251 = vdwg.mxu0
        %v252 = vld [vmem:[#allocation2] sm:$0xf]
        %v253 = vld [vmem:[#allocation2 + $0x4] sm:$0xf]
        %v254 = vld [vmem:[#allocation2 + $0x8] sm:$0xf]
        %v255 = vld [vmem:[#allocation2 + $0xc] sm:$0xf]
        %v256 = vld [vmem:[#allocation2 + $0x10] sm:$0xf]
        %v257 = vld [vmem:[#allocation2 + $0x14] sm:$0xf]
        %v258 = vld [vmem:[#allocation2 + $0x18] sm:$0xf]
        %v259 = vld [vmem:[#allocation2 + $0x1c] sm:$0xf]
        %v260 = vld [vmem:[#allocation2 + $0x20] sm:$0xf]
        %v261 = vld [vmem:[#allocation2 + $0x24] sm:$0xf]
        %v262 = vld [vmem:[#allocation2 + $0x28] sm:$0xf]
        %v263 = vld [vmem:[#allocation2 + $0x2c] sm:$0xf]
        %v264 = vld [vmem:[#allocation2 + $0x30] sm:$0xf]
        %v265 = vld [vmem:[#allocation2 + $0x34] sm:$0xf]
        %v266 = vld [vmem:[#allocation2 + $0x38] sm:$0xf]
        %v267 = vld [vmem:[#allocation2 + $0x3c] sm:$0xf]
        %v268 = vpack.c.bf16 %v250, %v247
        %v269 = vld [vmem:[%s3] ss:$0 sm:$0xff]
        %v286 = vunpack.c.l.b16 %v252
        %v287 = vunpack.c.l.b16 %v253
        %v288 = vunpack.c.l.b16 %v254
        %v289 = vunpack.c.l.b16 %v255
        %v290 = vunpack.c.l.b16 %v256
        %v291 = vunpack.c.l.b16 %v257
        %v292 = vunpack.c.l.b16 %v258
        %v293 = vunpack.c.l.b16 %v259
        %v294 = vunpack.c.l.b16 %v260
        %v295 = vunpack.c.l.b16 %v261
        %v296 = vunpack.c.l.b16 %v262
        %v297 = vunpack.c.l.b16 %v263
        %v298 = vunpack.c.l.b16 %v264
        %v299 = vunpack.c.l.b16 %v265
        %v300 = vunpack.c.l.b16 %v266
        %v301 = vunpack.c.l.b16 %v267
        %v302 = vpack.c.b16 %v287, %v286
        %v303 = vpack.c.b16 %v289, %v288
        %v304 = vpack.c.b16 %v291, %v290
        %v305 = vpack.c.b16 %v293, %v292
        %v306 = vpack.c.b16 %v295, %v294
        %v307 = vpack.c.b16 %v297, %v296
        %v308 = vpack.c.b16 %v299, %v298
        %v309 = vpack.c.b16 %v301, %v300
        %318 = vmatpush.bf16.msra.mxu0 %v309
        %319 = vmatpush.bf16.msra.mxu0 %v308
        %320 = vmatpush.bf16.msra.mxu0 %v307
        %321 = vmatpush.bf16.msra.mxu0 %v306
        %322 = vmatpush.bf16.msra.mxu0 %v305
        %323 = vmatpush.bf16.msra.mxu0 %v304
        %324 = vmatpush.bf16.msra.mxu0 %v303
        %325 = vmatpush.bf16.msra.mxu0 %v302
        %326 = vmatmul.bf16.gmra.mxu0 %v268
        %v327 = vpop.f32.mrf.mxu0
        %v328 = vadd.f32 %v269, %v327
        %v329 = vpop.f32.mrf.mxu0
        %v330 = vadd.f32 %v269, %v329
        %331 = vdwg.mxu0
        %v332 = vmax.f32 %v328, 0.0
        %v333 = vmax.f32 %v330, 0.0
        %v334 = vld [vmem:[#allocation2 + $0x40] sm:$0xf]
        %v335 = vld [vmem:[#allocation2 + $0x44] sm:$0xf]
        %v336 = vld [vmem:[#allocation2 + $0x48] sm:$0xf]
        %v337 = vld [vmem:[#allocation2 + $0x4c] sm:$0xf]
        %v338 = vld [vmem:[#allocation2 + $0x50] sm:$0xf]
        %v339 = vld [vmem:[#allocation2 + $0x54] sm:$0xf]
        %v340 = vld [vmem:[#allocation2 + $0x58] sm:$0xf]
        %v341 = vld [vmem:[#allocation2 + $0x5c] sm:$0xf]
        %v342 = vld [vmem:[#allocation2 + $0x60] sm:$0xf]
        %v343 = vld [vmem:[#allocation2 + $0x64] sm:$0xf]
        %v344 = vld [vmem:[#allocation2 + $0x68] sm:$0xf]
        %v345 = vld [vmem:[#allocation2 + $0x6c] sm:$0xf]
        %v346 = vld [vmem:[#allocation2 + $0x70] sm:$0xf]
        %v347 = vld [vmem:[#allocation2 + $0x74] sm:$0xf]
        %v348 = vld [vmem:[#allocation2 + $0x78] sm:$0xf]
        %v349 = vld [vmem:[#allocation2 + $0x7c] sm:$0xf]
        %v350 = vpack.c.bf16 %v333, %v332
        %v351 = vld [vmem:[%s3 + $0x1] ss:$0 sm:$0xff]
        %v368 = vunpack.c.l.b16 %v334
        %v369 = vunpack.c.l.b16 %v335
        %v370 = vunpack.c.l.b16 %v336
        %v371 = vunpack.c.l.b16 %v337
        %v372 = vunpack.c.l.b16 %v338
        %v373 = vunpack.c.l.b16 %v339
        %v374 = vunpack.c.l.b16 %v340
        %v375 = vunpack.c.l.b16 %v341
        %v376 = vunpack.c.l.b16 %v342
        %v377 = vunpack.c.l.b16 %v343
        %v378 = vunpack.c.l.b16 %v344
        %v379 = vunpack.c.l.b16 %v345
        %v380 = vunpack.c.l.b16 %v346
        %v381 = vunpack.c.l.b16 %v347
        %v382 = vunpack.c.l.b16 %v348
        %v383 = vunpack.c.l.b16 %v349
        %v384 = vpack.c.b16 %v369, %v368
        %v385 = vpack.c.b16 %v371, %v370
        %v386 = vpack.c.b16 %v373, %v372
        %v387 = vpack.c.b16 %v375, %v374
        %v388 = vpack.c.b16 %v377, %v376
        %v389 = vpack.c.b16 %v379, %v378
        %v390 = vpack.c.b16 %v381, %v380
        %v391 = vpack.c.b16 %v383, %v382
        %400 = vmatpush.bf16.msra.mxu0 %v391
        %401 = vmatpush.bf16.msra.mxu0 %v390
        %402 = vmatpush.bf16.msra.mxu0 %v389
        %403 = vmatpush.bf16.msra.mxu0 %v388
        %404 = vmatpush.bf16.msra.mxu0 %v387
        %405 = vmatpush.bf16.msra.mxu0 %v386
        %406 = vmatpush.bf16.msra.mxu0 %v385
        %407 = vmatpush.bf16.msra.mxu0 %v384
        %408 = vmatmul.bf16.gmra.mxu0 %v350
        %v409 = vpop.f32.mrf.mxu0
        %v410 = vadd.f32 %v351, %v409
        %v411 = vpop.f32.mrf.mxu0
        %v412 = vadd.f32 %v351, %v411
        %413 = vdwg.mxu0
        %v414 = vld [vmem:[%s2] sm:$0xff]
        %v415 = vld [vmem:[%s2 + $0x8] sm:$0xff]
        %v416 = vld [vmem:[%s2 + $0x10] sm:$0xff]
        %v417 = vld [vmem:[%s2 + $0x18] sm:$0xff]
        %v418 = vld [vmem:[%s2 + $0x20] sm:$0xff]
        %v419 = vld [vmem:[%s2 + $0x28] sm:$0xff]
        %v420 = vld [vmem:[%s2 + $0x30] sm:$0xff]
        %v421 = vld [vmem:[%s2 + $0x38] sm:$0xff]
        %v422 = vld [vmem:[%s2 + $0x40] sm:$0xff]
        %v423 = vld [vmem:[%s2 + $0x48] sm:$0xff]
        %v424 = vld [vmem:[%s2 + $0x50] sm:$0xff]
        %v425 = vld [vmem:[%s2 + $0x58] sm:$0xff]
        %v426 = vld [vmem:[%s2 + $0x60] sm:$0xff]
        %v427 = vld [vmem:[%s2 + $0x68] sm:$0xff]
        %v428 = vld [vmem:[%s2 + $0x70] sm:$0xff]
        %v429 = vld [vmem:[%s2 + $0x78] sm:$0xff]
        %v430 = vld [vmem:[%s2 + $0x80] sm:$0xff]
        %v431 = vld [vmem:[%s2 + $0x88] sm:$0xff]
        %v432 = vld [vmem:[%s2 + $0x90] sm:$0xff]
        %v433 = vld [vmem:[%s2 + $0x98] sm:$0xff]
        %v434 = vld [vmem:[%s2 + $0xa0] sm:$0xff]
        %v435 = vld [vmem:[%s2 + $0xa8] sm:$0xff]
        %v436 = vld [vmem:[%s2 + $0xb0] sm:$0xff]
        %v437 = vld [vmem:[%s2 + $0xb8] sm:$0xff]
        %v438 = vld [vmem:[%s2 + $0xc0] sm:$0xff]
        %v439 = vld [vmem:[%s2 + $0xc8] sm:$0xff]
        %v440 = vld [vmem:[%s2 + $0xd0] sm:$0xff]
        %v441 = vld [vmem:[%s2 + $0xd8] sm:$0xff]
        %v442 = vld [vmem:[%s2 + $0xe0] sm:$0xff]
        %v443 = vld [vmem:[%s2 + $0xe8] sm:$0xff]
        %v444 = vld [vmem:[%s2 + $0xf0] sm:$0xff]
        %v445 = vld [vmem:[%s2 + $0xf8] sm:$0xff]
        %v446 = vpack.c.bf16 %v410, %v410
        %v447 = vpack.c.bf16 %v412, %v412
        %s448 = scalar_lea.vmem %s3, 16
        %v449 = vld [vmem:[%s448] ss:$8 sm:$0x3]
        %v451 = vperm.slane %v449, 0
        %v452 = vperm.slane %v449, 1
        %v487 = vunpack.c.l.b16 %v414
        %v488 = vunpack.c.h.b16 %v414
        %v489 = vunpack.c.l.b16 %v415
        %v490 = vunpack.c.h.b16 %v415
        %v491 = vunpack.c.l.b16 %v416
        %v492 = vunpack.c.h.b16 %v416
        %v493 = vunpack.c.l.b16 %v417
        %v494 = vunpack.c.h.b16 %v417
        %v495 = vunpack.c.l.b16 %v418
        %v496 = vunpack.c.h.b16 %v418
        %v497 = vunpack.c.l.b16 %v419
        %v498 = vunpack.c.h.b16 %v419
        %v499 = vunpack.c.l.b16 %v420
        %v500 = vunpack.c.h.b16 %v420
        %v501 = vunpack.c.l.b16 %v421
        %v502 = vunpack.c.h.b16 %v421
        %v503 = vunpack.c.l.b16 %v422
        %v504 = vunpack.c.h.b16 %v422
        %v505 = vunpack.c.l.b16 %v423
        %v506 = vunpack.c.h.b16 %v423
        %v507 = vunpack.c.l.b16 %v424
        %v508 = vunpack.c.h.b16 %v424
        %v509 = vunpack.c.l.b16 %v425
        %v510 = vunpack.c.h.b16 %v425
        %v511 = vunpack.c.l.b16 %v426
        %v512 = vunpack.c.h.b16 %v426
        %v513 = vunpack.c.l.b16 %v427
        %v514 = vunpack.c.h.b16 %v427
        %v515 = vunpack.c.l.b16 %v428
        %v516 = vunpack.c.h.b16 %v428
        %v517 = vunpack.c.l.b16 %v429
        %v518 = vunpack.c.h.b16 %v429
        %v519 = vunpack.c.l.b16 %v430
        %v520 = vunpack.c.h.b16 %v430
        %v521 = vunpack.c.l.b16 %v431
        %v522 = vunpack.c.h.b16 %v431
        %v523 = vunpack.c.l.b16 %v432
        %v524 = vunpack.c.h.b16 %v432
        %v525 = vunpack.c.l.b16 %v433
        %v526 = vunpack.c.h.b16 %v433
        %v527 = vunpack.c.l.b16 %v434
        %v528 = vunpack.c.h.b16 %v434
        %v529 = vunpack.c.l.b16 %v435
        %v530 = vunpack.c.h.b16 %v435
        %v531 = vunpack.c.l.b16 %v436
        %v532 = vunpack.c.h.b16 %v436
        %v533 = vunpack.c.l.b16 %v437
        %v534 = vunpack.c.h.b16 %v437
        %v535 = vunpack.c.l.b16 %v438
        %v536 = vunpack.c.h.b16 %v438
        %v537 = vunpack.c.l.b16 %v439
        %v538 = vunpack.c.h.b16 %v439
        %v539 = vunpack.c.l.b16 %v440
        %v540 = vunpack.c.h.b16 %v440
        %v541 = vunpack.c.l.b16 %v441
        %v542 = vunpack.c.h.b16 %v441
        %v543 = vunpack.c.l.b16 %v442
        %v544 = vunpack.c.h.b16 %v442
        %v545 = vunpack.c.l.b16 %v443
        %v546 = vunpack.c.h.b16 %v443
        %v547 = vunpack.c.l.b16 %v444
        %v548 = vunpack.c.h.b16 %v444
        %v549 = vunpack.c.l.b16 %v445
        %v550 = vunpack.c.h.b16 %v445
        %v551 = vpack.c.b16 %v489, %v487
        %v552 = vpack.c.b16 %v490, %v488
        %v553 = vpack.c.b16 %v493, %v491
        %v554 = vpack.c.b16 %v494, %v492
        %v555 = vpack.c.b16 %v497, %v495
        %v556 = vpack.c.b16 %v498, %v496
        %v557 = vpack.c.b16 %v501, %v499
        %v558 = vpack.c.b16 %v502, %v500
        %v559 = vpack.c.b16 %v505, %v503
        %v560 = vpack.c.b16 %v506, %v504
        %v561 = vpack.c.b16 %v509, %v507
        %v562 = vpack.c.b16 %v510, %v508
        %v563 = vpack.c.b16 %v513, %v511
        %v564 = vpack.c.b16 %v514, %v512
        %v565 = vpack.c.b16 %v517, %v515
        %v566 = vpack.c.b16 %v518, %v516
        %v567 = vpack.c.b16 %v521, %v519
        %v568 = vpack.c.b16 %v522, %v520
        %v569 = vpack.c.b16 %v525, %v523
        %v570 = vpack.c.b16 %v526, %v524
        %v571 = vpack.c.b16 %v529, %v527
        %v572 = vpack.c.b16 %v530, %v528
        %v573 = vpack.c.b16 %v533, %v531
        %v574 = vpack.c.b16 %v534, %v532
        %v575 = vpack.c.b16 %v537, %v535
        %v576 = vpack.c.b16 %v538, %v536
        %v577 = vpack.c.b16 %v541, %v539
        %v578 = vpack.c.b16 %v542, %v540
        %v579 = vpack.c.b16 %v545, %v543
        %v580 = vpack.c.b16 %v546, %v544
        %v581 = vpack.c.b16 %v549, %v547
        %v582 = vpack.c.b16 %v550, %v548
        %615 = vmatpush.bf16.msra.mxu0 %v565
        %616 = vmatpush.bf16.msra.mxu0 %v563
        %617 = vmatpush.bf16.msra.mxu0 %v561
        %618 = vmatpush.bf16.msra.mxu0 %v559
        %619 = vmatpush.bf16.msra.mxu0 %v557
        %620 = vmatpush.bf16.msra.mxu0 %v555
        %621 = vmatpush.bf16.msra.mxu0 %v553
        %622 = vmatpush.bf16.msra.mxu0 %v551
        %623 = vmatmul.bf16.gmra.mxu0 %v446
        %v624 = vpop.f32.mrf.mxu0
        %v625 = vadd.f32 %v451, %v624
        %v626 = vpop.f32.mrf.mxu0
        %627 = vdwg.mxu0
        %628 = vmatpush.bf16.msra.mxu0 %v581
        %629 = vmatpush.bf16.msra.mxu0 %v579
        %630 = vmatpush.bf16.msra.mxu0 %v577
        %631 = vmatpush.bf16.msra.mxu0 %v575
        %632 = vmatpush.bf16.msra.mxu0 %v573
        %633 = vmatpush.bf16.msra.mxu0 %v571
        %634 = vmatpush.bf16.msra.mxu0 %v569
        %635 = vmatpush.bf16.msra.mxu0 %v567
        %636 = vmatmul.bf16.gmra.mxu0 %v447
        %v637 = vpop.f32.mrf.mxu0
        %v638 = vadd.f32 %v625, %v637
        %v639 = vpop.f32.mrf.mxu0
        %640 = vdwg.mxu0
        %641 = vmatpush.bf16.msra.mxu0 %v566
        %642 = vmatpush.bf16.msra.mxu0 %v564
        %643 = vmatpush.bf16.msra.mxu0 %v562
        %644 = vmatpush.bf16.msra.mxu0 %v560
        %645 = vmatpush.bf16.msra.mxu0 %v558
        %646 = vmatpush.bf16.msra.mxu0 %v556
        %647 = vmatpush.bf16.msra.mxu0 %v554
        %648 = vmatpush.bf16.msra.mxu0 %v552
        %649 = vmatmul.bf16.gmra.mxu0 %v446
        %v650 = vpop.f32.mrf.mxu0
        %v651 = vadd.f32 %v452, %v650
        %v652 = vpop.f32.mrf.mxu0
        %653 = vdwg.mxu0
        %654 = vmatpush.bf16.msra.mxu0 %v582
        %655 = vmatpush.bf16.msra.mxu0 %v580
        %656 = vmatpush.bf16.msra.mxu0 %v578
        %657 = vmatpush.bf16.msra.mxu0 %v576
        %658 = vmatpush.bf16.msra.mxu0 %v574
        %659 = vmatpush.bf16.msra.mxu0 %v572
        %660 = vmatpush.bf16.msra.mxu0 %v570
        %661 = vmatpush.bf16.msra.mxu0 %v568
        %662 = vmatmul.bf16.gmra.mxu0 %v447
        %v663 = vpop.f32.mrf.mxu0
        %v664 = vadd.f32 %v651, %v663
        %v665 = vpop.f32.mrf.mxu0
        %666 = vdwg.mxu0
        %v667 = vld [vmem:[#allocation2 + $0x80] sm:$0xf]
        %v668 = vld [vmem:[#allocation2 + $0x84] sm:$0xf]
        %v669 = vld [vmem:[#allocation2 + $0x88] sm:$0xf]
        %v670 = vld [vmem:[#allocation2 + $0x8c] sm:$0xf]
        %v671 = vld [vmem:[#allocation2 + $0x90] sm:$0xf]
        %v672 = vld [vmem:[#allocation2 + $0x94] sm:$0xf]
        %v673 = vld [vmem:[#allocation2 + $0x98] sm:$0xf]
        %v674 = vld [vmem:[#allocation2 + $0x9c] sm:$0xf]
        %v675 = vld [vmem:[#allocation2 + $0xa0] sm:$0xf]
        %v676 = vld [vmem:[#allocation2 + $0xa4] sm:$0xf]
        %v677 = vld [vmem:[#allocation2 + $0xa8] sm:$0xf]
        %v678 = vld [vmem:[#allocation2 + $0xac] sm:$0xf]
        %v679 = vld [vmem:[#allocation2 + $0xb0] sm:$0xf]
        %v680 = vld [vmem:[#allocation2 + $0xb4] sm:$0xf]
        %v681 = vld [vmem:[#allocation2 + $0xb8] sm:$0xf]
        %v682 = vld [vmem:[#allocation2 + $0xbc] sm:$0xf]
        %v683 = vld [vmem:[#allocation2 + $0xc0] sm:$0xf]
        %v684 = vld [vmem:[#allocation2 + $0xc4] sm:$0xf]
        %v685 = vld [vmem:[#allocation2 + $0xc8] sm:$0xf]
        %v686 = vld [vmem:[#allocation2 + $0xcc] sm:$0xf]
        %v687 = vld [vmem:[#allocation2 + $0xd0] sm:$0xf]
        %v688 = vld [vmem:[#allocation2 + $0xd4] sm:$0xf]
        %v689 = vld [vmem:[#allocation2 + $0xd8] sm:$0xf]
        %v690 = vld [vmem:[#allocation2 + $0xdc] sm:$0xf]
        %v691 = vld [vmem:[#allocation2 + $0xe0] sm:$0xf]
        %v692 = vld [vmem:[#allocation2 + $0xe4] sm:$0xf]
        %v693 = vld [vmem:[#allocation2 + $0xe8] sm:$0xf]
        %v694 = vld [vmem:[#allocation2 + $0xec] sm:$0xf]
        %v695 = vld [vmem:[#allocation2 + $0xf0] sm:$0xf]
        %v696 = vld [vmem:[#allocation2 + $0xf4] sm:$0xf]
        %v697 = vld [vmem:[#allocation2 + $0xf8] sm:$0xf]
        %v698 = vld [vmem:[#allocation2 + $0xfc] sm:$0xf]
        %v699 = vpack.c.bf16 %v412, %v410
        %v700 = vpack.c.bf16 %v638, %v664
        %v701 = vld [vmem:[%s3 + $0x2] ss:$0 sm:$0xff]
        %v734 = vunpack.c.l.b16 %v667
        %v735 = vunpack.c.l.b16 %v668
        %v736 = vunpack.c.l.b16 %v669
        %v737 = vunpack.c.l.b16 %v670
        %v738 = vunpack.c.l.b16 %v671
        %v739 = vunpack.c.l.b16 %v672
        %v740 = vunpack.c.l.b16 %v673
        %v741 = vunpack.c.l.b16 %v674
        %v742 = vunpack.c.l.b16 %v675
        %v743 = vunpack.c.l.b16 %v676
        %v744 = vunpack.c.l.b16 %v677
        %v745 = vunpack.c.l.b16 %v678
        %v746 = vunpack.c.l.b16 %v679
        %v747 = vunpack.c.l.b16 %v680
        %v748 = vunpack.c.l.b16 %v681
        %v749 = vunpack.c.l.b16 %v682
        %v750 = vunpack.c.l.b16 %v683
        %v751 = vunpack.c.l.b16 %v684
        %v752 = vunpack.c.l.b16 %v685
        %v753 = vunpack.c.l.b16 %v686
        %v754 = vunpack.c.l.b16 %v687
        %v755 = vunpack.c.l.b16 %v688
        %v756 = vunpack.c.l.b16 %v689
        %v757 = vunpack.c.l.b16 %v690
        %v758 = vunpack.c.l.b16 %v691
        %v759 = vunpack.c.l.b16 %v692
        %v760 = vunpack.c.l.b16 %v693
        %v761 = vunpack.c.l.b16 %v694
        %v762 = vunpack.c.l.b16 %v695
        %v763 = vunpack.c.l.b16 %v696
        %v764 = vunpack.c.l.b16 %v697
        %v765 = vunpack.c.l.b16 %v698
        %v766 = vpack.c.b16 %v735, %v734
        %v767 = vpack.c.b16 %v737, %v736
        %v768 = vpack.c.b16 %v739, %v738
        %v769 = vpack.c.b16 %v741, %v740
        %v770 = vpack.c.b16 %v743, %v742
        %v771 = vpack.c.b16 %v745, %v744
        %v772 = vpack.c.b16 %v747, %v746
        %v773 = vpack.c.b16 %v749, %v748
        %v774 = vpack.c.b16 %v751, %v750
        %v775 = vpack.c.b16 %v753, %v752
        %v776 = vpack.c.b16 %v755, %v754
        %v777 = vpack.c.b16 %v757, %v756
        %v778 = vpack.c.b16 %v759, %v758
        %v779 = vpack.c.b16 %v761, %v760
        %v780 = vpack.c.b16 %v763, %v762
        %v781 = vpack.c.b16 %v765, %v764
        %798 = vmatpush.bf16.msra.mxu0 %v773
        %799 = vmatpush.bf16.msra.mxu0 %v772
        %800 = vmatpush.bf16.msra.mxu0 %v771
        %801 = vmatpush.bf16.msra.mxu0 %v770
        %802 = vmatpush.bf16.msra.mxu0 %v769
        %803 = vmatpush.bf16.msra.mxu0 %v768
        %804 = vmatpush.bf16.msra.mxu0 %v767
        %805 = vmatpush.bf16.msra.mxu0 %v766
        %806 = vmatmul.bf16.gmra.mxu0 %v699
        %v807 = vpop.f32.mrf.mxu0
        %v808 = vadd.f32 %v701, %v807
        %v809 = vpop.f32.mrf.mxu0
        %v810 = vadd.f32 %v701, %v809
        %811 = vdwg.mxu0
        %812 = vmatpush.bf16.msra.mxu0 %v781
        %813 = vmatpush.bf16.msra.mxu0 %v780
        %814 = vmatpush.bf16.msra.mxu0 %v779
        %815 = vmatpush.bf16.msra.mxu0 %v778
        %816 = vmatpush.bf16.msra.mxu0 %v777
        %817 = vmatpush.bf16.msra.mxu0 %v776
        %818 = vmatpush.bf16.msra.mxu0 %v775
        %819 = vmatpush.bf16.msra.mxu0 %v774
        %820 = vmatmul.bf16.gmra.mxu0 %v700
        %v821 = vpop.f32.mrf.mxu0
        %v822 = vadd.f32 %v808, %v821
        %v823 = vpop.f32.mrf.mxu0
        %v824 = vadd.f32 %v810, %v823
        %825 = vdwg.mxu0
        %v826 = vmax.f32 %v822, 0.0
        %v827 = vmax.f32 %v824, 0.0
        %v828 = vld [vmem:[#allocation2 + $0x100] sm:$0xf]
        %v829 = vld [vmem:[#allocation2 + $0x104] sm:$0xf]
        %v830 = vld [vmem:[#allocation2 + $0x108] sm:$0xf]
        %v831 = vld [vmem:[#allocation2 + $0x10c] sm:$0xf]
        %v832 = vld [vmem:[#allocation2 + $0x110] sm:$0xf]
        %v833 = vld [vmem:[#allocation2 + $0x114] sm:$0xf]
        %v834 = vld [vmem:[#allocation2 + $0x118] sm:$0xf]
        %v835 = vld [vmem:[#allocation2 + $0x11c] sm:$0xf]
        %v836 = vld [vmem:[#allocation2 + $0x120] sm:$0xf]
        %v837 = vld [vmem:[#allocation2 + $0x124] sm:$0xf]
        %v838 = vld [vmem:[#allocation2 + $0x128] sm:$0xf]
        %v839 = vld [vmem:[#allocation2 + $0x12c] sm:$0xf]
        %v840 = vld [vmem:[#allocation2 + $0x130] sm:$0xf]
        %v841 = vld [vmem:[#allocation2 + $0x134] sm:$0xf]
        %v842 = vld [vmem:[#allocation2 + $0x138] sm:$0xf]
        %v843 = vld [vmem:[#allocation2 + $0x13c] sm:$0xf]
        %v844 = vpack.c.bf16 %v827, %v826
        %v845 = vld [vmem:[%s3 + $0x3] ss:$0 sm:$0xff]
        %v862 = vunpack.c.l.b16 %v828
        %v863 = vunpack.c.l.b16 %v829
        %v864 = vunpack.c.l.b16 %v830
        %v865 = vunpack.c.l.b16 %v831
        %v866 = vunpack.c.l.b16 %v832
        %v867 = vunpack.c.l.b16 %v833
        %v868 = vunpack.c.l.b16 %v834
        %v869 = vunpack.c.l.b16 %v835
        %v870 = vunpack.c.l.b16 %v836
        %v871 = vunpack.c.l.b16 %v837
        %v872 = vunpack.c.l.b16 %v838
        %v873 = vunpack.c.l.b16 %v839
        %v874 = vunpack.c.l.b16 %v840
        %v875 = vunpack.c.l.b16 %v841
        %v876 = vunpack.c.l.b16 %v842
        %v877 = vunpack.c.l.b16 %v843
        %v878 = vpack.c.b16 %v863, %v862
        %v879 = vpack.c.b16 %v865, %v864
        %v880 = vpack.c.b16 %v867, %v866
        %v881 = vpack.c.b16 %v869, %v868
        %v882 = vpack.c.b16 %v871, %v870
        %v883 = vpack.c.b16 %v873, %v872
        %v884 = vpack.c.b16 %v875, %v874
        %v885 = vpack.c.b16 %v877, %v876
        %894 = vmatpush.bf16.msra.mxu0 %v885
        %895 = vmatpush.bf16.msra.mxu0 %v884
        %896 = vmatpush.bf16.msra.mxu0 %v883
        %897 = vmatpush.bf16.msra.mxu0 %v882
        %898 = vmatpush.bf16.msra.mxu0 %v881
        %899 = vmatpush.bf16.msra.mxu0 %v880
        %900 = vmatpush.bf16.msra.mxu0 %v879
        %901 = vmatpush.bf16.msra.mxu0 %v878
        %902 = vmatmul.bf16.gmra.mxu0 %v844
        %v903 = vpop.f32.mrf.mxu0
        %v904 = vadd.f32 %v845, %v903
        %v905 = vpop.f32.mrf.mxu0
        %v906 = vadd.f32 %v845, %v905
        %907 = vdwg.mxu0
        %v909 = vsel %vm222, %v215, 0
        %v912 = vsel %vm222, %v216, 0
        %v915 = vsel %vm222, %v217, 0
        %917 = vmatpush.msra.mxu0 0.0
        %918 = vmatpush.msra.mxu0 0.0
        %919 = vmatpush.msra.mxu0 0.0
        %920 = vmatpush.msra.mxu0 0.0
        %921 = vmatpush.msra.mxu0 0.0
        %922 = vmatpush.msra.mxu0 0.0
        %923 = vmatpush.msra.mxu0 0.0
        %924 = vmatpush.msra.mxu0 0.0
        %925 = vmatpush.msra.mxu0 0.0
        %926 = vmatpush.msra.mxu0 0.0
        %927 = vmatpush.msra.mxu0 0.0
        %928 = vmatpush.msra.mxu0 0.0
        %929 = vmatpush.msra.mxu0 0.0
        %930 = vmatpush.msra.mxu0 0.0
        %931 = vmatpush.msra.mxu0 %v906
        %932 = vmatpush.msra.mxu0 %v904
        %933 = vmatmul.f32.gmra.mxu0 %v909
        %v934 = vpop.f32.mrf.mxu0
        %v935 = vadd.f32 0.0, %v934
        %936 = vmatmul.f32.gmra.mxu0 %v912
        %v937 = vpop.f32.mrf.mxu0
        %v938 = vadd.f32 0.0, %v937
        %939 = vmatmul.f32.gmra.mxu0 %v915
        %v940 = vpop.f32.mrf.mxu0
        %v941 = vadd.f32 0.0, %v940
        %942 = vdwg.mxu0
        %v943 = vmax.f32 %v935, %v938
        %v944 = vmax.f32 %v943, %v941
        %v945 = vrot.slane %v944, 4
        %v946 = vmax.f32 %v944, %v945
        %v947 = vrot.slane %v946, 2
        %v948 = vmax.f32 %v946, %v947
        %v949 = vrot.slane %v948, 1
        %v950 = vmax.f32 %v948, %v949
        %v951 = vsub.f32 %v935, %v950
        %v952 = vsub.f32 %v938, %v950
        %v953 = vsub.f32 %v941, %v950
        %v954 = vmul.f32 %v951, 1.442695
        %v955 = vpow.pop %v954
        %v956 = vmul.f32 %v952, 1.442695
        %v957 = vpow.pop %v956
        %v958 = vmul.f32 %v953, 1.442695
        %v959 = vpow.pop %v958
        %vm960 = vcmask 195584
        %v962 = vsel %vm960, %v218, 0
        %v965 = vsel %vm960, %v219, 0
        %967 = vmatpush.msra.mxu0 0.0
        %968 = vmatpush.msra.mxu0 0.0
        %969 = vmatpush.msra.mxu0 0.0
        %970 = vmatpush.msra.mxu0 0.0
        %971 = vmatpush.msra.mxu0 0.0
        %972 = vmatpush.msra.mxu0 0.0
        %973 = vmatpush.msra.mxu0 0.0
        %974 = vmatpush.msra.mxu0 0.0
        %975 = vmatpush.msra.mxu0 0.0
        %976 = vmatpush.msra.mxu0 0.0
        %977 = vmatpush.msra.mxu0 0.0
        %978 = vmatpush.msra.mxu0 0.0
        %979 = vmatpush.msra.mxu0 0.0
        %980 = vmatpush.msra.mxu0 %v959
        %981 = vmatpush.msra.mxu0 %v957
        %982 = vmatpush.msra.mxu0 %v955
        %983 = vmatmul.f32.gmra.mxu0 %v962
        %v984 = vpop.f32.mrf.mxu0
        %v985 = vadd.f32 0.0, %v984
        %986 = vmatmul.f32.gmra.mxu0 %v965
        %v987 = vpop.f32.mrf.mxu0
        %v988 = vadd.f32 0.0, %v987
        %989 = vdwg.mxu0
        %v990 = vmax.f32 %v985, 1.1754944e-38
        %v991 = vmax.f32 %v988, 1.1754944e-38
        %v992 = vlog2.pop %v990
        %v993 = vmul.f32 %v992, 0.6931472
        %v994 = vlog2.pop %v991
        %v995 = vmul.f32 %v994, 0.6931472
        %v996 = vadd.f32 %v993, %v950
        %v997 = vadd.f32 %v995, %v950
        %v998 = vld [vmem:[#allocation2 + $0x140] sm:$0xf]
        %v999 = vld [vmem:[#allocation2 + $0x144] sm:$0xf]
        %v1000 = vld [vmem:[#allocation2 + $0x148] sm:$0xf]
        %v1001 = vld [vmem:[#allocation2 + $0x14c] sm:$0xf]
        %v1002 = vld [vmem:[#allocation2 + $0x150] sm:$0xf]
        %v1003 = vld [vmem:[#allocation2 + $0x154] sm:$0xf]
        %v1004 = vld [vmem:[#allocation2 + $0x158] sm:$0xf]
        %v1005 = vld [vmem:[#allocation2 + $0x15c] sm:$0xf]
        %v1006 = vld [vmem:[#allocation2 + $0x160] sm:$0xf]
        %v1007 = vld [vmem:[#allocation2 + $0x164] sm:$0xf]
        %v1008 = vld [vmem:[#allocation2 + $0x168] sm:$0xf]
        %v1009 = vld [vmem:[#allocation2 + $0x16c] sm:$0xf]
        %v1010 = vld [vmem:[#allocation2 + $0x170] sm:$0xf]
        %v1011 = vld [vmem:[#allocation2 + $0x174] sm:$0xf]
        %v1012 = vld [vmem:[#allocation2 + $0x178] sm:$0xf]
        %v1013 = vld [vmem:[#allocation2 + $0x17c] sm:$0xf]
        %v1014 = vpack.c.bf16 %v997, %v996
        %v1015 = vld [vmem:[%s3 + $0x4] ss:$0 sm:$0xff]
        %v1032 = vunpack.c.l.b16 %v998
        %v1033 = vunpack.c.l.b16 %v999
        %v1034 = vunpack.c.l.b16 %v1000
        %v1035 = vunpack.c.l.b16 %v1001
        %v1036 = vunpack.c.l.b16 %v1002
        %v1037 = vunpack.c.l.b16 %v1003
        %v1038 = vunpack.c.l.b16 %v1004
        %v1039 = vunpack.c.l.b16 %v1005
        %v1040 = vunpack.c.l.b16 %v1006
        %v1041 = vunpack.c.l.b16 %v1007
        %v1042 = vunpack.c.l.b16 %v1008
        %v1043 = vunpack.c.l.b16 %v1009
        %v1044 = vunpack.c.l.b16 %v1010
        %v1045 = vunpack.c.l.b16 %v1011
        %v1046 = vunpack.c.l.b16 %v1012
        %v1047 = vunpack.c.l.b16 %v1013
        %v1048 = vpack.c.b16 %v1033, %v1032
        %v1049 = vpack.c.b16 %v1035, %v1034
        %v1050 = vpack.c.b16 %v1037, %v1036
        %v1051 = vpack.c.b16 %v1039, %v1038
        %v1052 = vpack.c.b16 %v1041, %v1040
        %v1053 = vpack.c.b16 %v1043, %v1042
        %v1054 = vpack.c.b16 %v1045, %v1044
        %v1055 = vpack.c.b16 %v1047, %v1046
        %1064 = vmatpush.bf16.msra.mxu0 %v1055
        %1065 = vmatpush.bf16.msra.mxu0 %v1054
        %1066 = vmatpush.bf16.msra.mxu0 %v1053
        %1067 = vmatpush.bf16.msra.mxu0 %v1052
        %1068 = vmatpush.bf16.msra.mxu0 %v1051
        %1069 = vmatpush.bf16.msra.mxu0 %v1050
        %1070 = vmatpush.bf16.msra.mxu0 %v1049
        %1071 = vmatpush.bf16.msra.mxu0 %v1048
        %1072 = vmatmul.bf16.gmra.mxu0 %v1014
        %v1073 = vpop.f32.mrf.mxu0
        %v1074 = vadd.f32 %v1015, %v1073
        %v1075 = vpop.f32.mrf.mxu0
        %v1076 = vadd.f32 %v1015, %v1075
        %1077 = vdwg.mxu0
        %v1078 = vmax.f32 %v1074, 0.0
        %v1079 = vmax.f32 %v1076, 0.0
        %v1080 = vld [vmem:[#allocation2 + $0x180] sm:$0xf]
        %v1081 = vld [vmem:[#allocation2 + $0x184] sm:$0xf]
        %v1082 = vld [vmem:[#allocation2 + $0x188] sm:$0xf]
        %v1083 = vld [vmem:[#allocation2 + $0x18c] sm:$0xf]
        %v1084 = vld [vmem:[#allocation2 + $0x190] sm:$0xf]
        %v1085 = vld [vmem:[#allocation2 + $0x194] sm:$0xf]
        %v1086 = vld [vmem:[#allocation2 + $0x198] sm:$0xf]
        %v1087 = vld [vmem:[#allocation2 + $0x19c] sm:$0xf]
        %v1088 = vld [vmem:[#allocation2 + $0x1a0] sm:$0xf]
        %v1089 = vld [vmem:[#allocation2 + $0x1a4] sm:$0xf]
        %v1090 = vld [vmem:[#allocation2 + $0x1a8] sm:$0xf]
        %v1091 = vld [vmem:[#allocation2 + $0x1ac] sm:$0xf]
        %v1092 = vld [vmem:[#allocation2 + $0x1b0] sm:$0xf]
        %v1093 = vld [vmem:[#allocation2 + $0x1b4] sm:$0xf]
        %v1094 = vld [vmem:[#allocation2 + $0x1b8] sm:$0xf]
        %v1095 = vld [vmem:[#allocation2 + $0x1bc] sm:$0xf]
        %v1096 = vpack.c.bf16 %v1079, %v1078
        %v1097 = vld [vmem:[%s3 + $0x5] ss:$0 sm:$0xff]
        %v1114 = vunpack.c.l.b16 %v1080
        %v1115 = vunpack.c.l.b16 %v1081
        %v1116 = vunpack.c.l.b16 %v1082
        %v1117 = vunpack.c.l.b16 %v1083
        %v1118 = vunpack.c.l.b16 %v1084
        %v1119 = vunpack.c.l.b16 %v1085
        %v1120 = vunpack.c.l.b16 %v1086
        %v1121 = vunpack.c.l.b16 %v1087
        %v1122 = vunpack.c.l.b16 %v1088
        %v1123 = vunpack.c.l.b16 %v1089
        %v1124 = vunpack.c.l.b16 %v1090
        %v1125 = vunpack.c.l.b16 %v1091
        %v1126 = vunpack.c.l.b16 %v1092
        %v1127 = vunpack.c.l.b16 %v1093
        %v1128 = vunpack.c.l.b16 %v1094
        %v1129 = vunpack.c.l.b16 %v1095
        %v1130 = vpack.c.b16 %v1115, %v1114
        %v1131 = vpack.c.b16 %v1117, %v1116
        %v1132 = vpack.c.b16 %v1119, %v1118
        %v1133 = vpack.c.b16 %v1121, %v1120
        %v1134 = vpack.c.b16 %v1123, %v1122
        %v1135 = vpack.c.b16 %v1125, %v1124
        %v1136 = vpack.c.b16 %v1127, %v1126
        %v1137 = vpack.c.b16 %v1129, %v1128
        %1146 = vmatpush.bf16.msra.mxu0 %v1137
        %1147 = vmatpush.bf16.msra.mxu0 %v1136
        %1148 = vmatpush.bf16.msra.mxu0 %v1135
        %1149 = vmatpush.bf16.msra.mxu0 %v1134
        %1150 = vmatpush.bf16.msra.mxu0 %v1133
        %1151 = vmatpush.bf16.msra.mxu0 %v1132
        %1152 = vmatpush.bf16.msra.mxu0 %v1131
        %1153 = vmatpush.bf16.msra.mxu0 %v1130
        %1154 = vmatmul.bf16.gmra.mxu0 %v1096
        %v1155 = vpop.f32.mrf.mxu0
        %v1156 = vadd.f32 %v1097, %v1155
        %v1157 = vpop.f32.mrf.mxu0
        %v1158 = vadd.f32 %v1097, %v1157
        %1159 = vdwg.mxu0
        %1160 = vmatpush.msra.mxu0 0.0
        %1161 = vmatpush.msra.mxu0 0.0
        %1162 = vmatpush.msra.mxu0 0.0
        %1163 = vmatpush.msra.mxu0 0.0
        %1164 = vmatpush.msra.mxu0 0.0
        %1165 = vmatpush.msra.mxu0 0.0
        %1166 = vmatpush.msra.mxu0 0.0
        %1167 = vmatpush.msra.mxu0 0.0
        %1168 = vmatpush.msra.mxu0 0.0
        %1169 = vmatpush.msra.mxu0 0.0
        %1170 = vmatpush.msra.mxu0 0.0
        %1171 = vmatpush.msra.mxu0 0.0
        %1172 = vmatpush.msra.mxu0 0.0
        %1173 = vmatpush.msra.mxu0 0.0
        %1174 = vmatpush.msra.mxu0 %v1158
        %1175 = vmatpush.msra.mxu0 %v1156
        %1176 = vmatmul.f32.gmra.mxu0 %v224
        %v1177 = vpop.f32.mrf.mxu0
        %v1178 = vadd.f32 0.0, %v1177
        %1179 = vmatmul.f32.gmra.mxu0 %v227
        %v1180 = vpop.f32.mrf.mxu0
        %v1181 = vadd.f32 0.0, %v1180
        %1182 = vdwg.mxu0
        %v1183 = vpack.c.bf16 %v1181, %v1178
        %1184 = vmatpush.bf16.msra.mxu0 %v309
        %1185 = vmatpush.bf16.msra.mxu0 %v308
        %1186 = vmatpush.bf16.msra.mxu0 %v307
        %1187 = vmatpush.bf16.msra.mxu0 %v306
        %1188 = vmatpush.bf16.msra.mxu0 %v305
        %1189 = vmatpush.bf16.msra.mxu0 %v304
        %1190 = vmatpush.bf16.msra.mxu0 %v303
        %1191 = vmatpush.bf16.msra.mxu0 %v302
        %1192 = vmatmul.bf16.gmra.mxu0 %v1183
        %v1193 = vpop.f32.mrf.mxu0
        %v1194 = vadd.f32 %v269, %v1193
        %v1195 = vpop.f32.mrf.mxu0
        %v1196 = vadd.f32 %v269, %v1195
        %1197 = vdwg.mxu0
        %v1198 = vmax.f32 %v1194, 0.0
        %v1199 = vmax.f32 %v1196, 0.0
        %v1200 = vpack.c.bf16 %v1199, %v1198
        %1201 = vmatpush.bf16.msra.mxu0 %v391
        %1202 = vmatpush.bf16.msra.mxu0 %v390
        %1203 = vmatpush.bf16.msra.mxu0 %v389
        %1204 = vmatpush.bf16.msra.mxu0 %v388
        %1205 = vmatpush.bf16.msra.mxu0 %v387
        %1206 = vmatpush.bf16.msra.mxu0 %v386
        %1207 = vmatpush.bf16.msra.mxu0 %v385
        %1208 = vmatpush.bf16.msra.mxu0 %v384
        %1209 = vmatmul.bf16.gmra.mxu0 %v1200
        %v1210 = vpop.f32.mrf.mxu0
        %v1211 = vadd.f32 %v351, %v1210
        %v1212 = vpop.f32.mrf.mxu0
        %v1213 = vadd.f32 %v351, %v1212
        %1214 = vdwg.mxu0
        %v1215 = vpack.c.bf16 %v1211, %v1211
        %v1216 = vpack.c.bf16 %v1213, %v1213
        %1217 = vmatpush.bf16.msra.mxu0 %v565
        %1218 = vmatpush.bf16.msra.mxu0 %v563
        %1219 = vmatpush.bf16.msra.mxu0 %v561
        %1220 = vmatpush.bf16.msra.mxu0 %v559
        %1221 = vmatpush.bf16.msra.mxu0 %v557
        %1222 = vmatpush.bf16.msra.mxu0 %v555
        %1223 = vmatpush.bf16.msra.mxu0 %v553
        %1224 = vmatpush.bf16.msra.mxu0 %v551
        %1225 = vmatmul.bf16.gmra.mxu0 %v1215
        %v1226 = vpop.f32.mrf.mxu0
        %v1227 = vadd.f32 %v451, %v1226
        %v1228 = vpop.f32.mrf.mxu0
        %1229 = vdwg.mxu0
        %1230 = vmatpush.bf16.msra.mxu0 %v581
        %1231 = vmatpush.bf16.msra.mxu0 %v579
        %1232 = vmatpush.bf16.msra.mxu0 %v577
        %1233 = vmatpush.bf16.msra.mxu0 %v575
        %1234 = vmatpush.bf16.msra.mxu0 %v573
        %1235 = vmatpush.bf16.msra.mxu0 %v571
        %1236 = vmatpush.bf16.msra.mxu0 %v569
        %1237 = vmatpush.bf16.msra.mxu0 %v567
        %1238 = vmatmul.bf16.gmra.mxu0 %v1216
        %v1239 = vpop.f32.mrf.mxu0
        %v1240 = vadd.f32 %v1227, %v1239
        %v1241 = vpop.f32.mrf.mxu0
        %1242 = vdwg.mxu0
        %1243 = vmatpush.bf16.msra.mxu0 %v566
        %1244 = vmatpush.bf16.msra.mxu0 %v564
        %1245 = vmatpush.bf16.msra.mxu0 %v562
        %1246 = vmatpush.bf16.msra.mxu0 %v560
        %1247 = vmatpush.bf16.msra.mxu0 %v558
        %1248 = vmatpush.bf16.msra.mxu0 %v556
        %1249 = vmatpush.bf16.msra.mxu0 %v554
        %1250 = vmatpush.bf16.msra.mxu0 %v552
        %1251 = vmatmul.bf16.gmra.mxu0 %v1215
        %v1252 = vpop.f32.mrf.mxu0
        %v1253 = vadd.f32 %v452, %v1252
        %v1254 = vpop.f32.mrf.mxu0
        %1255 = vdwg.mxu0
        %1256 = vmatpush.bf16.msra.mxu0 %v582
        %1257 = vmatpush.bf16.msra.mxu0 %v580
        %1258 = vmatpush.bf16.msra.mxu0 %v578
        %1259 = vmatpush.bf16.msra.mxu0 %v576
        %1260 = vmatpush.bf16.msra.mxu0 %v574
        %1261 = vmatpush.bf16.msra.mxu0 %v572
        %1262 = vmatpush.bf16.msra.mxu0 %v570
        %1263 = vmatpush.bf16.msra.mxu0 %v568
        %1264 = vmatmul.bf16.gmra.mxu0 %v1216
        %v1265 = vpop.f32.mrf.mxu0
        %v1266 = vadd.f32 %v1253, %v1265
        %v1267 = vpop.f32.mrf.mxu0
        %1268 = vdwg.mxu0
        %v1269 = vpack.c.bf16 %v1213, %v1211
        %v1270 = vpack.c.bf16 %v1240, %v1266
        %1271 = vmatpush.bf16.msra.mxu0 %v773
        %1272 = vmatpush.bf16.msra.mxu0 %v772
        %1273 = vmatpush.bf16.msra.mxu0 %v771
        %1274 = vmatpush.bf16.msra.mxu0 %v770
        %1275 = vmatpush.bf16.msra.mxu0 %v769
        %1276 = vmatpush.bf16.msra.mxu0 %v768
        %1277 = vmatpush.bf16.msra.mxu0 %v767
        %1278 = vmatpush.bf16.msra.mxu0 %v766
        %1279 = vmatmul.bf16.gmra.mxu0 %v1269
        %v1280 = vpop.f32.mrf.mxu0
        %v1281 = vadd.f32 %v701, %v1280
        %v1282 = vpop.f32.mrf.mxu0
        %v1283 = vadd.f32 %v701, %v1282
        %1284 = vdwg.mxu0
        %1285 = vmatpush.bf16.msra.mxu0 %v781
        %1286 = vmatpush.bf16.msra.mxu0 %v780
        %1287 = vmatpush.bf16.msra.mxu0 %v779
        %1288 = vmatpush.bf16.msra.mxu0 %v778
        %1289 = vmatpush.bf16.msra.mxu0 %v777
        %1290 = vmatpush.bf16.msra.mxu0 %v776
        %1291 = vmatpush.bf16.msra.mxu0 %v775
        %1292 = vmatpush.bf16.msra.mxu0 %v774
        %1293 = vmatmul.bf16.gmra.mxu0 %v1270
        %v1294 = vpop.f32.mrf.mxu0
        %v1295 = vadd.f32 %v1281, %v1294
        %v1296 = vpop.f32.mrf.mxu0
        %v1297 = vadd.f32 %v1283, %v1296
        %1298 = vdwg.mxu0
        %v1299 = vmax.f32 %v1295, 0.0
        %v1300 = vmax.f32 %v1297, 0.0
        %v1301 = vpack.c.bf16 %v1300, %v1299
        %1302 = vmatpush.bf16.msra.mxu0 %v885
        %1303 = vmatpush.bf16.msra.mxu0 %v884
        %1304 = vmatpush.bf16.msra.mxu0 %v883
        %1305 = vmatpush.bf16.msra.mxu0 %v882
        %1306 = vmatpush.bf16.msra.mxu0 %v881
        %1307 = vmatpush.bf16.msra.mxu0 %v880
        %1308 = vmatpush.bf16.msra.mxu0 %v879
        %1309 = vmatpush.bf16.msra.mxu0 %v878
        %1310 = vmatmul.bf16.gmra.mxu0 %v1301
        %v1311 = vpop.f32.mrf.mxu0
        %v1312 = vadd.f32 %v845, %v1311
        %v1313 = vpop.f32.mrf.mxu0
        %v1314 = vadd.f32 %v845, %v1313
        %1315 = vdwg.mxu0
        %1316 = vmatpush.msra.mxu0 0.0
        %1317 = vmatpush.msra.mxu0 0.0
        %1318 = vmatpush.msra.mxu0 0.0
        %1319 = vmatpush.msra.mxu0 0.0
        %1320 = vmatpush.msra.mxu0 0.0
        %1321 = vmatpush.msra.mxu0 0.0
        %1322 = vmatpush.msra.mxu0 0.0
        %1323 = vmatpush.msra.mxu0 0.0
        %1324 = vmatpush.msra.mxu0 0.0
        %1325 = vmatpush.msra.mxu0 0.0
        %1326 = vmatpush.msra.mxu0 0.0
        %1327 = vmatpush.msra.mxu0 0.0
        %1328 = vmatpush.msra.mxu0 0.0
        %1329 = vmatpush.msra.mxu0 0.0
        %1330 = vmatpush.msra.mxu0 %v1314
        %1331 = vmatpush.msra.mxu0 %v1312
        %1332 = vmatmul.f32.gmra.mxu0 %v909
        %v1333 = vpop.f32.mrf.mxu0
        %v1334 = vadd.f32 0.0, %v1333
        %1335 = vmatmul.f32.gmra.mxu0 %v912
        %v1336 = vpop.f32.mrf.mxu0
        %v1337 = vadd.f32 0.0, %v1336
        %1338 = vmatmul.f32.gmra.mxu0 %v915
        %v1339 = vpop.f32.mrf.mxu0
        %v1340 = vadd.f32 0.0, %v1339
        %1341 = vdwg.mxu0
        %v1342 = vmax.f32 %v1334, %v1337
        %v1343 = vmax.f32 %v1342, %v1340
        %v1344 = vrot.slane %v1343, 4
        %v1345 = vmax.f32 %v1343, %v1344
        %v1346 = vrot.slane %v1345, 2
        %v1347 = vmax.f32 %v1345, %v1346
        %v1348 = vrot.slane %v1347, 1
        %v1349 = vmax.f32 %v1347, %v1348
        %v1350 = vsub.f32 %v1334, %v1349
        %v1351 = vsub.f32 %v1337, %v1349
        %v1352 = vsub.f32 %v1340, %v1349
        %v1353 = vmul.f32 %v1350, 1.442695
        %v1354 = vpow.pop %v1353
        %v1355 = vmul.f32 %v1351, 1.442695
        %v1356 = vpow.pop %v1355
        %v1357 = vmul.f32 %v1352, 1.442695
        %v1358 = vpow.pop %v1357
        %1359 = vmatpush.msra.mxu0 0.0
        %1360 = vmatpush.msra.mxu0 0.0
        %1361 = vmatpush.msra.mxu0 0.0
        %1362 = vmatpush.msra.mxu0 0.0
        %1363 = vmatpush.msra.mxu0 0.0
        %1364 = vmatpush.msra.mxu0 0.0
        %1365 = vmatpush.msra.mxu0 0.0
        %1366 = vmatpush.msra.mxu0 0.0
        %1367 = vmatpush.msra.mxu0 0.0
        %1368 = vmatpush.msra.mxu0 0.0
        %1369 = vmatpush.msra.mxu0 0.0
        %1370 = vmatpush.msra.mxu0 0.0
        %1371 = vmatpush.msra.mxu0 0.0
        %1372 = vmatpush.msra.mxu0 %v1358
        %1373 = vmatpush.msra.mxu0 %v1356
        %1374 = vmatpush.msra.mxu0 %v1354
        %1375 = vmatmul.f32.gmra.mxu0 %v962
        %v1376 = vpop.f32.mrf.mxu0
        %v1377 = vadd.f32 0.0, %v1376
        %1378 = vmatmul.f32.gmra.mxu0 %v965
        %v1379 = vpop.f32.mrf.mxu0
        %v1380 = vadd.f32 0.0, %v1379
        %1381 = vdwg.mxu0
        %v1382 = vmax.f32 %v1377, 1.1754944e-38
        %v1383 = vmax.f32 %v1380, 1.1754944e-38
        %v1384 = vlog2.pop %v1382
        %v1385 = vmul.f32 %v1384, 0.6931472
        %v1386 = vlog2.pop %v1383
        %v1387 = vmul.f32 %v1386, 0.6931472
        %v1388 = vadd.f32 %v1385, %v1349
        %v1389 = vadd.f32 %v1387, %v1349
        %v1390 = vpack.c.bf16 %v1389, %v1388
        %1391 = vmatpush.bf16.msra.mxu0 %v1055
        %1392 = vmatpush.bf16.msra.mxu0 %v1054
        %1393 = vmatpush.bf16.msra.mxu0 %v1053
        %1394 = vmatpush.bf16.msra.mxu0 %v1052
        %1395 = vmatpush.bf16.msra.mxu0 %v1051
        %1396 = vmatpush.bf16.msra.mxu0 %v1050
        %1397 = vmatpush.bf16.msra.mxu0 %v1049
        %1398 = vmatpush.bf16.msra.mxu0 %v1048
        %1399 = vmatmul.bf16.gmra.mxu0 %v1390
        %v1400 = vpop.f32.mrf.mxu0
        %v1401 = vadd.f32 %v1015, %v1400
        %v1402 = vpop.f32.mrf.mxu0
        %v1403 = vadd.f32 %v1015, %v1402
        %1404 = vdwg.mxu0
        %v1405 = vmax.f32 %v1401, 0.0
        %v1406 = vmax.f32 %v1403, 0.0
        %v1407 = vpack.c.bf16 %v1406, %v1405
        %1408 = vmatpush.bf16.msra.mxu0 %v1137
        %1409 = vmatpush.bf16.msra.mxu0 %v1136
        %1410 = vmatpush.bf16.msra.mxu0 %v1135
        %1411 = vmatpush.bf16.msra.mxu0 %v1134
        %1412 = vmatpush.bf16.msra.mxu0 %v1133
        %1413 = vmatpush.bf16.msra.mxu0 %v1132
        %1414 = vmatpush.bf16.msra.mxu0 %v1131
        %1415 = vmatpush.bf16.msra.mxu0 %v1130
        %1416 = vmatmul.bf16.gmra.mxu0 %v1407
        %v1417 = vpop.f32.mrf.mxu0
        %v1418 = vadd.f32 %v1097, %v1417
        %v1419 = vpop.f32.mrf.mxu0
        %v1420 = vadd.f32 %v1097, %v1419
        %1421 = vdwg.mxu0
        %v1423 = vsel %vm222, %v220, 0
        %1425 = vmatpush.msra.mxu0 0.0
        %1426 = vmatpush.msra.mxu0 0.0
        %1427 = vmatpush.msra.mxu0 0.0
        %1428 = vmatpush.msra.mxu0 0.0
        %1429 = vmatpush.msra.mxu0 0.0
        %1430 = vmatpush.msra.mxu0 0.0
        %1431 = vmatpush.msra.mxu0 0.0
        %1432 = vmatpush.msra.mxu0 0.0
        %1433 = vmatpush.msra.mxu0 0.0
        %1434 = vmatpush.msra.mxu0 0.0
        %1435 = vmatpush.msra.mxu0 0.0
        %1436 = vmatpush.msra.mxu0 0.0
        %1437 = vmatpush.msra.mxu0 0.0
        %1438 = vmatpush.msra.mxu0 0.0
        %1439 = vmatpush.msra.mxu0 %v1420
        %1440 = vmatpush.msra.mxu0 %v1418
        %1441 = vmatmul.f32.gmra.mxu0 %v1423
        %v1442 = vpop.f32.mrf.mxu0
        %v1443 = vadd.f32 0.0, %v1442
        %1444 = vdwg.mxu0
        %v1445 = vld [vmem:[#allocation2 + $0x1c0] sm:$0xf]
        %v1446 = vld [vmem:[#allocation2 + $0x1c4] sm:$0xf]
        %v1447 = vld [vmem:[#allocation2 + $0x1c8] sm:$0xf]
        %v1448 = vld [vmem:[#allocation2 + $0x1cc] sm:$0xf]
        %v1449 = vld [vmem:[#allocation2 + $0x1d0] sm:$0xf]
        %v1450 = vld [vmem:[#allocation2 + $0x1d4] sm:$0xf]
        %v1451 = vld [vmem:[#allocation2 + $0x1d8] sm:$0xf]
        %v1452 = vld [vmem:[#allocation2 + $0x1dc] sm:$0xf]
        %v1453 = vld [vmem:[#allocation2 + $0x1e0] sm:$0xf]
        %v1454 = vld [vmem:[#allocation2 + $0x1e4] sm:$0xf]
        %v1455 = vld [vmem:[#allocation2 + $0x1e8] sm:$0xf]
        %v1456 = vld [vmem:[#allocation2 + $0x1ec] sm:$0xf]
        %v1457 = vld [vmem:[#allocation2 + $0x1f0] sm:$0xf]
        %v1458 = vld [vmem:[#allocation2 + $0x1f4] sm:$0xf]
        %v1459 = vld [vmem:[#allocation2 + $0x1f8] sm:$0xf]
        %v1460 = vld [vmem:[#allocation2 + $0x1fc] sm:$0xf]
        %v1461 = vpack.c.bf16 %v1443, %v1443
        %v1462 = vld [vmem:[%s3 + $0x6] ss:$0 sm:$0xff]
        %v1479 = vunpack.c.l.b16 %v1445
        %v1480 = vunpack.c.l.b16 %v1446
        %v1481 = vunpack.c.l.b16 %v1447
        %v1482 = vunpack.c.l.b16 %v1448
        %v1483 = vunpack.c.l.b16 %v1449
        %v1484 = vunpack.c.l.b16 %v1450
        %v1485 = vunpack.c.l.b16 %v1451
        %v1486 = vunpack.c.l.b16 %v1452
        %v1487 = vunpack.c.l.b16 %v1453
        %v1488 = vunpack.c.l.b16 %v1454
        %v1489 = vunpack.c.l.b16 %v1455
        %v1490 = vunpack.c.l.b16 %v1456
        %v1491 = vunpack.c.l.b16 %v1457
        %v1492 = vunpack.c.l.b16 %v1458
        %v1493 = vunpack.c.l.b16 %v1459
        %v1494 = vunpack.c.l.b16 %v1460
        %v1495 = vpack.c.b16 %v1480, %v1479
        %v1496 = vpack.c.b16 %v1482, %v1481
        %v1497 = vpack.c.b16 %v1484, %v1483
        %v1498 = vpack.c.b16 %v1486, %v1485
        %v1499 = vpack.c.b16 %v1488, %v1487
        %v1500 = vpack.c.b16 %v1490, %v1489
        %v1501 = vpack.c.b16 %v1492, %v1491
        %v1502 = vpack.c.b16 %v1494, %v1493
        %1511 = vmatpush.bf16.msra.mxu0 %v1502
        %1512 = vmatpush.bf16.msra.mxu0 %v1501
        %1513 = vmatpush.bf16.msra.mxu0 %v1500
        %1514 = vmatpush.bf16.msra.mxu0 %v1499
        %1515 = vmatpush.bf16.msra.mxu0 %v1498
        %1516 = vmatpush.bf16.msra.mxu0 %v1497
        %1517 = vmatpush.bf16.msra.mxu0 %v1496
        %1518 = vmatpush.bf16.msra.mxu0 %v1495
        %1519 = vmatmul.bf16.gmra.mxu0 %v1461
        %v1520 = vpop.f32.mrf.mxu0
        %v1521 = vadd.f32 %v1462, %v1520
        %v1522 = vpop.f32.mrf.mxu0
        %1523 = vdwg.mxu0
        %v1524 = vmax.f32 %v1521, 0.0
        %v1525 = vld [vmem:[#allocation2 + $0x200] sm:$0xf]
        %v1526 = vld [vmem:[#allocation2 + $0x204] sm:$0xf]
        %v1527 = vld [vmem:[#allocation2 + $0x208] sm:$0xf]
        %v1528 = vld [vmem:[#allocation2 + $0x20c] sm:$0xf]
        %v1529 = vld [vmem:[#allocation2 + $0x210] sm:$0xf]
        %v1530 = vld [vmem:[#allocation2 + $0x214] sm:$0xf]
        %v1531 = vld [vmem:[#allocation2 + $0x218] sm:$0xf]
        %v1532 = vld [vmem:[#allocation2 + $0x21c] sm:$0xf]
        %v1533 = vld [vmem:[#allocation2 + $0x220] sm:$0xf]
        %v1534 = vld [vmem:[#allocation2 + $0x224] sm:$0xf]
        %v1535 = vld [vmem:[#allocation2 + $0x228] sm:$0xf]
        %v1536 = vld [vmem:[#allocation2 + $0x22c] sm:$0xf]
        %v1537 = vld [vmem:[#allocation2 + $0x230] sm:$0xf]
        %v1538 = vld [vmem:[#allocation2 + $0x234] sm:$0xf]
        %v1539 = vld [vmem:[#allocation2 + $0x238] sm:$0xf]
        %v1540 = vld [vmem:[#allocation2 + $0x23c] sm:$0xf]
        %v1541 = vpack.c.bf16 %v1524, %v1524
        %v1542 = vld [vmem:[%s3 + $0x7] ss:$0 sm:$0xff]
        %v1559 = vunpack.c.l.b16 %v1525
        %v1560 = vunpack.c.l.b16 %v1526
        %v1561 = vunpack.c.l.b16 %v1527
        %v1562 = vunpack.c.l.b16 %v1528
        %v1563 = vunpack.c.l.b16 %v1529
        %v1564 = vunpack.c.l.b16 %v1530
        %v1565 = vunpack.c.l.b16 %v1531
        %v1566 = vunpack.c.l.b16 %v1532
        %v1567 = vunpack.c.l.b16 %v1533
        %v1568 = vunpack.c.l.b16 %v1534
        %v1569 = vunpack.c.l.b16 %v1535
        %v1570 = vunpack.c.l.b16 %v1536
        %v1571 = vunpack.c.l.b16 %v1537
        %v1572 = vunpack.c.l.b16 %v1538
        %v1573 = vunpack.c.l.b16 %v1539
        %v1574 = vunpack.c.l.b16 %v1540
        %v1575 = vpack.c.b16 %v1560, %v1559
        %v1576 = vpack.c.b16 %v1562, %v1561
        %v1577 = vpack.c.b16 %v1564, %v1563
        %v1578 = vpack.c.b16 %v1566, %v1565
        %v1579 = vpack.c.b16 %v1568, %v1567
        %v1580 = vpack.c.b16 %v1570, %v1569
        %v1581 = vpack.c.b16 %v1572, %v1571
        %v1582 = vpack.c.b16 %v1574, %v1573
        %1591 = vmatpush.bf16.msra.mxu0 %v1582
        %1592 = vmatpush.bf16.msra.mxu0 %v1581
        %1593 = vmatpush.bf16.msra.mxu0 %v1580
        %1594 = vmatpush.bf16.msra.mxu0 %v1579
        %1595 = vmatpush.bf16.msra.mxu0 %v1578
        %1596 = vmatpush.bf16.msra.mxu0 %v1577
        %1597 = vmatpush.bf16.msra.mxu0 %v1576
        %1598 = vmatpush.bf16.msra.mxu0 %v1575
        %1599 = vmatmul.bf16.gmra.mxu0 %v1541
        %v1600 = vpop.f32.mrf.mxu0
        %v1601 = vadd.f32 %v1542, %v1600
        %v1602 = vpop.f32.mrf.mxu0
        %1603 = vdwg.mxu0
        %v1605 = vrot.slane %v1601, 4
        %v1607 = vmax.f32 %v1601, %v1605
        %v1608 = vsub.f32 %v1601, %v1607
        %v1609 = vmul.f32 %v1608, 1.442695
        %v1610 = vpow.pop %v1609
        %v1612 = vrot.slane %v1607, 4
        %v1614 = vsub.f32 %v1601, %v1612
        %v1615 = vmul.f32 %v1614, 1.442695
        %v1616 = vpow.pop %v1615
        %v1618 = vrot.slane %v1616, 4
        %v1620 = vadd.f32 %v1610, %v1618
        %v1621 = vrcp.pop %v1620
        %v1622 = vmul.f32 %v1620, %v1621
        %v1623 = vsub.f32 1.0, %v1622
        %v1624 = vmul.f32 %v1621, %v1623
        %v1625 = vadd.f32 %v1621, %v1624
        %vm1626 = vweird.f32 %v1620
        %vm1627 = vweird.f32 %v1621
        %vm1628 = vmor %vm1626, %vm1627
        %v1629 = vsel %vm1628, %v1621, %v1625
        %v1630 = vand.u32 2147483647, %v1620
        %vm1631 = vcmp.eq.f32.partialorder %v1630, 8.507059e+37
        %v1632 = vand.u32 %v1620, 2147483648
        %v1633 = vor.u32 1.1754944e-38, %v1632
        %v1634 = vsel %vm1631, %v1633, %v1629
        %v1635 = vmul.f32 %v1610, %v1634
        %v1637 = vrot.slane %v1620, 4
        %v1639 = vrcp.pop %v1637
        %v1640 = vmul.f32 %v1637, %v1639
        %v1641 = vsub.f32 1.0, %v1640
        %v1642 = vmul.f32 %v1639, %v1641
        %v1643 = vadd.f32 %v1639, %v1642
        %vm1644 = vweird.f32 %v1637
        %vm1645 = vweird.f32 %v1639
        %vm1646 = vmor %vm1644, %vm1645
        %v1647 = vsel %vm1646, %v1639, %v1643
        %v1648 = vand.u32 2147483647, %v1637
        %vm1649 = vcmp.eq.f32.partialorder %v1648, 8.507059e+37
        %v1650 = vand.u32 %v1637, 2147483648
        %v1651 = vor.u32 1.1754944e-38, %v1650
        %v1652 = vsel %vm1649, %v1651, %v1647
        %v1653 = vmul.f32 %v1616, %v1652
        %v1655 = vrot.slane %v1653, 4
        %1656 = vrot.lane.b32.xlu0 %v1655, 1
        %v1657 = vpop.permute.xlu0 %1656
        %vm1659 = vcmask 7168
        %v1660 = vsel %vm1659, %v1635, %v1657
        %vm1661 = vcmask 11264
        %1662 = vst.msk [vmem:[%s212] sm:$0xf] %vm1661, %v1660
        %p1663 = scmp.lt.s32.totalorder %s16, 3
        %s1664 = scalar_select %p1663, %s16, 3
        %s1665 = smul.addr %s1664, 4
        %s1666 = scalar_lea.vmem %s4, %s1665
        // Predicated region
        $region41: #{tpu_custom_call.1} parent=35 // pred_check
          %p1667 = pneg %p123
        $region42: #{tpu_custom_call.1} parent=35 // pred_check_branch
          %1669 = sbr.rel (%p1667) target = $region44
        $region43: #{tpu_custom_call.1} parent=35 // pred_region
          _
        $region44: #{tpu_custom_call.1} parent=35 // pred_fallthru
          _
      $region36: #{tpu_custom_call.1} parent=5 // pred_fallthru
        _
      %p1670 = scmp.le.s32.totalorder 2, %s11
      // Predicated region
      $region45: #{tpu_custom_call.1} parent=5 // pred_check
        %p1671 = pneg %p1670
      $region46: #{tpu_custom_call.1} parent=5 // pred_check_branch
        %1673 = sbr.rel (%p1671) target = $region48
      $region47: #{tpu_custom_call.1} parent=5 // pred_region
        %s1674 = ssub.s32 %s11, 2
        // Predicated region
        $region49: #{tpu_custom_call.1} parent=47 // pred_check
          %p1675 = pneg %p129
        $region50: #{tpu_custom_call.1} parent=47 // pred_check_branch
          %1677 = sbr.rel (%p1675) target = $region52
        $region51: #{tpu_custom_call.1} parent=47 // pred_region
          %p1678 = scmp.lt.s32.totalorder %s17, 3
          %s1679 = scalar_select %p1678, %s17, 3
          %s1680 = smul.addr %s1679, 4
          %s1681 = scalar_lea.vmem %s4, %s1680
        $region52: #{tpu_custom_call.1} parent=47 // pred_fallthru
          _
      $region48: #{tpu_custom_call.1} parent=5 // pred_fallthru
        _
    $region6: #{tpu_custom_call.1} parent=1 // loop_footer
      %s15 = sadd.s32 1, %s11
    $region7: #{tpu_custom_call.1} parent=1 // loop_footer_branch
      %10 = sbr.rel target = $region3
    $region8: #{tpu_custom_call.1} parent=1 // loop_exit
      _
    %1682 = vsyncpa [#allocation3], 1
    %s1683 = scalar_lea.sflag [#allocation3], 1
    %1684 = vsyncpa %s1683, 1

</llo_original>
